<compile_context>
chip_gen: v7x
topology: tpu7x:2x2x1
jax: 0.10.0
libtpu: 0.0.40
codegen_flags: <defaults>
</compile_context>

<pallas_src>
import jax
import jax.numpy as jnp
from jax.experimental import pallas as pl
from jax.experimental.pallas import tpu as pltpu


# Max rows per grid step for the packed (R, 128) pointwise kernels.
_ROW_TILE = 2048


# ----------------------------------------------------------------------------
# in-kernel math helpers
# ----------------------------------------------------------------------------
def _erf(x):
    # TODO(synk): Mosaic has no exact erf lowering; Abramowitz&Stegun 7.1.26
    # polynomial (|err| < 1.5e-7 ~ f32 eps) keeps exact-GELU semantics to
    # within float32 noise, entirely in-kernel (EUP exp).
    a1, a2, a3, a4, a5 = 0.254829592, -0.284496736, 1.421413741, -1.453152027, 1.061405429
    p = 0.3275911
    s = jnp.sign(x)
    ax = jnp.abs(x)
    t = 1.0 / (1.0 + p * ax)
    poly = ((((a5 * t + a4) * t + a3) * t + a2) * t + a1) * t
    return s * (1.0 - poly * jnp.exp(-ax * ax))


def _gelu(x):
    # exact (erf-based) GELU, matching torch.nn.GELU() default
    return 0.5 * x * (1.0 + _erf(x * 0.7071067811865476))


def _ln(x, w, b, eps):
    # PyTorch channels_first LayerNorm, applied per pixel over the lane (C) dim
    u = jnp.mean(x, axis=-1, keepdims=True)
    xc = x - u
    s = jnp.mean(xc * xc, axis=-1, keepdims=True)
    return xc * jax.lax.rsqrt(s + eps) * w + b


# ----------------------------------------------------------------------------
# lane-dense pixel packing helpers (JAX glue, outside the kernels)
# ----------------------------------------------------------------------------
def _round_up(n, m):
    return ((n + m - 1) // m) * m


def _pack_geom(c):
    """Pick (pixels-per-row KP, padded channels CP) so that KP*CP == 128."""
    if c > 64:
        return 1, c                       # no packing possible; old layout
    kp = 1
    while kp < 64 and 128 // (kp * 2) >= c:
        kp *= 2
    return kp, 128 // kp


def _pack_rows(a2d, kp, cp):
    """(P, C) -> (ceil(P/KP), KP*CP) with zero padding (lane-dense rows)."""
    P, C = a2d.shape
    pk = -(-P // kp)
    pad_r, pad_c = pk * kp - P, cp - C
    if pad_r or pad_c:
        a2d = jnp.pad(a2d, ((0, pad_r), (0, pad_c)))
    return a2d.reshape(pk, kp * cp)


def _unpack_rows(a_pk, P, C, kp, cp):
    return a_pk.reshape(-1, cp)[:P, :C]


def _bd_weight(w_cio, kp, cp):
    """(Ci, Co) 1x1-conv weight -> (KP*CP, KP*CP) block-diagonal matmul weight."""
    ci, co = w_cio.shape
    wp = jnp.zeros((cp, cp), jnp.float32).at[:ci, :co].set(w_cio.astype(jnp.float32))
    return jnp.kron(jnp.eye(kp, dtype=jnp.float32), wp)


def _bd_bias(v, kp, cp):
    """(C,) bias / LN affine vector -> (1, KP*CP), zeros in padded lanes."""
    c = v.shape[0]
    vp = jnp.zeros((cp,), jnp.float32).at[:c].set(v.astype(jnp.float32))
    return jnp.tile(vp, kp).reshape(1, kp * cp)


def _bd_mean(c, kp, cp):
    """Group-mean matrix: (x @ M) broadcasts each pixel's channel mean over
    its CP-lane group while ignoring the zero-padded lanes (runs on the MXU)."""
    a = jnp.zeros((cp, cp), jnp.float32).at[:c, :].set(1.0 / c)
    return jnp.kron(jnp.eye(kp, dtype=jnp.float32), a)


# ----------------------------------------------------------------------------
# row-tiled pallas_call builder for the packed pointwise kernels
# ----------------------------------------------------------------------------
def _choose_tm(R):
    # Aim for >= ~4 grid steps (v7x has 2 TensorCores; double-buffer overlap),
    # never tile beyond the data or _ROW_TILE.
    tm = max(256, _round_up((R + 3) // 4, 8))
    tm = min(tm, _ROW_TILE, _round_up(R, 8))
    return max(tm, 8)


def _row_call(kernel, big_inputs, small_inputs, out_cols):
    """Run `kernel` over row tiles of (R, L) slabs.

    big_inputs  : list of (R, L) arrays, tiled (TM, L) on a 1-D parallel grid.
    small_inputs: grid-invariant 2-D arrays (weights/biases), whole-array
                  blocks (DMA'd once, resident across the row grid).
    out_cols    : list of output lane counts; each output is (R, c) float32.
    """
    R = big_inputs[0].shape[0]
    tm = _choose_tm(R)
    Rp = _round_up(R, tm)
    big = [jnp.pad(a, ((0, Rp - R), (0, 0))) if Rp != R else a for a in big_inputs]

    in_specs = [pl.BlockSpec((tm, a.shape[1]), lambda i: (i, 0)) for a in big]
    in_specs += [pl.BlockSpec(s.shape, lambda i: (0, 0)) for s in small_inputs]
    out_specs = tuple(pl.BlockSpec((tm, c), lambda i: (i, 0)) for c in out_cols)
    out_shape = tuple(jax.ShapeDtypeStruct((Rp, c), jnp.float32) for c in out_cols)
    single = len(out_cols) == 1

    # Explicit VMEM budget: double-buffered row slabs + resident weights
    # + headroom (resolves the v7x 64 MiB-VMEM TODO from the previous rev).
    slab_bytes = (sum(a.shape[1] for a in big) + sum(out_cols)) * tm * 4 * 2
    small_bytes = sum(int(s.size) * 4 for s in small_inputs) * 2
    vmem_limit = int(min(slab_bytes + small_bytes + (8 << 20), 64 << 20))

    outs = pl.pallas_call(
        kernel,
        grid=(Rp // tm,),
        in_specs=in_specs,
        out_specs=out_specs[0] if single else out_specs,
        out_shape=out_shape[0] if single else out_shape,
        compiler_params=pltpu.CompilerParams(
            dimension_semantics=("parallel",),
            vmem_limit_bytes=vmem_limit),
    )(*big, *small_inputs)

    if single:
        outs = (outs,)
    outs = tuple(o[:R] if Rp != R else o for o in outs)
    return outs[0] if single else outs


# ----------------------------------------------------------------------------
# packed pointwise Pallas kernels
# ----------------------------------------------------------------------------
def layernorm_packed(x_pk, w, b, C, kp, cp, eps=1e-6):
    """channels_first LayerNorm in the packed (R, KP*CP) layout.

    The per-pixel mean/variance over each CP-lane group is computed with a
    block-diagonal group-mean matmul (MXU) -- no cross-lane VPU reductions,
    padded lanes stay exactly zero."""
    L = kp * cp
    small = [_bd_mean(C, kp, cp), _bd_bias(w, kp, cp), _bd_bias(b, kp, cp)]

    def kernel(x_ref, m_ref, w_ref, b_ref, o_ref):
        x = x_ref[...]
        m = m_ref[...]
        u = jnp.dot(x, m, preferred_element_type=jnp.float32)
        xc = x - u
        var = jnp.dot(xc * xc, m, preferred_element_type=jnp.float32)
        o_ref[...] = xc * jax.lax.rsqrt(var + eps) * w_ref[...] + b_ref[...]

    return _row_call(kernel, [x_pk], small, [L])


def safm_aggr_packed(s_pk, xn_pk, x_pk, w, b, C, kp, cp):
    """SAFM tail: gelu(aggr_1x1(s)) * xn + x, one block-diagonal MXU dot."""
    L = kp * cp
    wm = w.reshape(C, C).T                       # torch (Co,Ci,1,1) -> (Ci,Co)
    small = [_bd_weight(wm, kp, cp), _bd_bias(b, kp, cp)]

    def kernel(s_ref, xn_ref, x_ref, w_ref, b_ref, o_ref):
        y = jnp.dot(s_ref[...], w_ref[...], preferred_element_type=jnp.float32)
        y = y + b_ref[...]
        o_ref[...] = _gelu(y) * xn_ref[...] + x_ref[...]

    return _row_call(kernel, [s_pk, xn_pk, x_pk], small, [L])


def fuse_packed(sp_pk, fr_pk, w, b, C, kp, cp):
    """fuse 1x1 conv on concat([spatial, freq]) without materializing the
    concat: the weight is split per part; two block-diagonal dots accumulate."""
    L = kp * cp
    wm = w.reshape(C, 2 * C).T                   # (2C, C), rows = input channels
    small = [_bd_weight(wm[:C], kp, cp), _bd_weight(wm[C:], kp, cp),
             _bd_bias(b, kp, cp)]

    def kernel(s_ref, f_ref, ws_ref, wf_ref, b_ref, o_ref):
        y = jnp.dot(s_ref[...], ws_ref[...], preferred_element_type=jnp.float32)
        y = y + jnp.dot(f_ref[...], wf_ref[...], preferred_element_type=jnp.float32)
        o_ref[...] = y + b_ref[...]

    return _row_call(kernel, [sp_pk, fr_pk], small, [L])


def freblock_packed(mag_pk, pha_pk, p, C, kp, cp):
    """Entire FreBlock fused: mag MLP, pha MLP (GELU in between) and
    polar->cartesian; the C/2 intermediates never leave VMEM and every 1x1
    conv is a single block-diagonal (128x128) dot."""
    L = kp * cp
    Ch = p["mag1_w"].shape[0]
    small = [
        _bd_weight(p["mag1_w"].reshape(Ch, C).T, kp, cp), _bd_bias(p["mag1_b"], kp, cp),
        _bd_weight(p["mag2_w"].reshape(C, Ch).T, kp, cp), _bd_bias(p["mag2_b"], kp, cp),
        _bd_weight(p["pha1_w"].reshape(Ch, C).T, kp, cp), _bd_bias(p["pha1_b"], kp, cp),
        _bd_weight(p["pha2_w"].reshape(C, Ch).T, kp, cp), _bd_bias(p["pha2_b"], kp, cp),
    ]

    def kernel(m_ref, p_ref, wm1, bm1, wm2, bm2, wp1, bp1, wp2, bp2,
               re_ref, im_ref):
        m = _gelu(jnp.dot(m_ref[...], wm1[...],
                          preferred_element_type=jnp.float32) + bm1[...])
        m = jnp.dot(m, wm2[...], preferred_element_type=jnp.float32) + bm2[...]
        ph = _gelu(jnp.dot(p_ref[...], wp1[...],
                           preferred_element_type=jnp.float32) + bp1[...])
        ph = jnp.dot(ph, wp2[...], preferred_element_type=jnp.float32) + bp2[...]
        re_ref[...] = m * jnp.cos(ph)
        im_ref[...] = m * jnp.sin(ph)

    return _row_call(kernel, [mag_pk, pha_pk], small, [L, L])


# ----------------------------------------------------------------------------
# 3x3 convolution Pallas kernels (NHWC, one output row per (N, H) grid step)
# ----------------------------------------------------------------------------
def dwconv3x3(x_nhwc, w, b):
    """Depthwise 3x3 conv (pad=1, groups=C).  w: torch (C,1,3,3); b: (C,).

    One output row per (N, H) grid step, built from three row-shifted views of
    the padded image (no 9x taps tensor in HBM); taps accumulate on the VPU."""
    N, H, W, C = x_nhwc.shape
    xp = jnp.pad(x_nhwc, ((0, 0), (1, 1), (1, 1), (0, 0)))
    wm = w.reshape(C, 9).T                       # (9, C), index ky*3+kx
    b2 = b.reshape(1, C)

    def kernel(top_ref, mid_ref, bot_ref, w_ref, b_ref, o_ref):
        rows = [top_ref[...][0, 0], mid_ref[...][0, 0], bot_ref[...][0, 0]]
        wv = w_ref[...]
        y = jnp.zeros((W, C), jnp.float32)
        for ky in range(3):
            r = rows[ky]
            for kx in range(3):
                t = ky * 3 + kx
                y = y + r[kx:kx + W, :] * wv[t:t + 1, :]
        o_ref[...] = (y + b_ref[...])[None, None, :, :]

    def row_spec(shift):
        return pl.BlockSpec((1, 1, W + 2, C), lambda n, h: (n, h + shift, 0, 0))

    return pl.pallas_call(
        kernel,
        grid=(N, H),
        in_specs=[row_spec(0), row_spec(1), row_spec(2),
                  pl.BlockSpec((9, C), lambda n, h: (0, 0)),
                  pl.BlockSpec((1, C), lambda n, h: (0, 0))],
        out_specs=pl.BlockSpec((1, 1, W, C), lambda n, h: (n, h, 0, 0)),
        out_shape=jax.ShapeDtypeStruct((N, H, W, C), jnp.float32),
        compiler_params=pltpu.CompilerParams(
            dimension_semantics=("parallel", "parallel")),
    )(xp, xp, xp, wm, b2)


def conv3x3_rows(x_nhwc, w1, b1, *, ln_w=None, ln_b=None, act="none",
                 w2=None, b2=None, residual=False, eps=1e-6):
    """Dense 3x3 conv (pad=1) over NHWC, one output row per (N, H) grid step,
    built from three row-shifted views of the padded image (no im2col in HBM).

    Optional fusions: per-pixel channels-first LayerNorm on the input (the
    padded border is re-zeroed after LN to match pad-after-norm semantics),
    GELU after the 3x3, a second 1x1 conv, and a residual add of the raw
    (pre-LN) input."""
    N, H, W, Ci = x_nhwc.shape
    Co1 = w1.shape[0]
    Co = w2.shape[0] if w2 is not None else Co1
    xp = jnp.pad(x_nhwc, ((0, 0), (1, 1), (1, 1), (0, 0)))

    w1m = jnp.transpose(w1, (2, 3, 1, 0)).reshape(9 * Ci, Co1)  # tap-major rows
    small = [w1m, b1.reshape(1, Co1)]
    has_ln = ln_w is not None
    if has_ln:
        small += [ln_w.reshape(1, Ci), ln_b.reshape(1, Ci)]
    has_w2 = w2 is not None
    if has_w2:
        small += [w2.reshape(Co, Co1).T, b2.reshape(1, Co)]

    def kernel(*refs):
        top_ref, mid_ref, bot_ref = refs[0], refs[1], refs[2]
        o_ref = refs[-1]
        sm = refs[3:-1]
        w1_ref, b1_ref = sm[0], sm[1]
        pos = 2
        if has_ln:
            lnw_ref, lnb_ref = sm[pos], sm[pos + 1]
            pos += 2
        if has_w2:
            w2_ref, b2_ref = sm[pos], sm[pos + 1]

        h = pl.program_id(1)
        nh = pl.num_programs(1)
        raw = [top_ref[...][0, 0], mid_ref[...][0, 0], bot_ref[...][0, 0]]  # (W+2, Ci)

        if has_ln:
            lw = lnw_ref[...]
            lb = lnb_ref[...]
            col = jax.lax.broadcasted_iota(jnp.int32, (W + 2, 1), 0)
            col_mask = ((col >= 1) & (col <= W)).astype(jnp.float32)
            top_ok = (h > 0).astype(jnp.float32)
            bot_ok = (h < nh - 1).astype(jnp.float32)
            rows = [
                _ln(raw[0], lw, lb, eps) * col_mask * top_ok,
                _ln(raw[1], lw, lb, eps) * col_mask,
                _ln(raw[2], lw, lb, eps) * col_mask * bot_ok,
            ]
        else:
            rows = raw

        # TODO(synk): fold the 9 tap-dots into one K=9*Ci im2col dot once an
        # unaligned lane-axis concatenate is confirmed to lower on Mosaic.
        w1v = w1_ref[...]                        # (9*Ci, Co1)
        y = jnp.zeros((W, Co1), jnp.float32)
        for ky in range(3):
            r = rows[ky]
            for kx in range(3):
                t = ky * 3 + kx
                y = y + jnp.dot(r[kx:kx + W, :], w1v[t * Ci:(t + 1) * Ci, :],
                                preferred_element_type=jnp.float32)
        y = y + b1_ref[...]
        if act == "gelu":
            y = _gelu(y)
        if has_w2:
            y = jnp.dot(y, w2_ref[...], preferred_element_type=jnp.float32) + b2_ref[...]
        if residual:
            y = y + raw[1][1:1 + W, :]           # raw (pre-LN) center row
        o_ref[...] = y[None, None, :, :]

    def row_spec(shift):
        return pl.BlockSpec((1, 1, W + 2, Ci), lambda n, h: (n, h + shift, 0, 0))

    small_specs = [pl.BlockSpec(s.shape, lambda n, h: (0, 0)) for s in small]

    return pl.pallas_call(
        kernel,
        grid=(N, H),
        in_specs=[row_spec(0), row_spec(1), row_spec(2)] + small_specs,
        out_specs=pl.BlockSpec((1, 1, W, Co), lambda n, h: (n, h, 0, 0)),
        out_shape=jax.ShapeDtypeStruct((N, H, W, Co), jnp.float32),
        compiler_params=pltpu.CompilerParams(
            dimension_semantics=("parallel", "parallel")),
    )(xp, xp, xp, *small)


# ----------------------------------------------------------------------------
# module forward passes
# ----------------------------------------------------------------------------
def safm_multiscale(p, xn_nhwc, n_levels=3):
    """Multi-scale depthwise branch of SAFM (before aggr); returns the
    channel-concatenated (N,H,W,C) feature so aggr needs a single dot."""
    N, H, W, C = xn_nhwc.shape
    cd = C // n_levels
    outs = []
    for i in range(n_levels):
        xi = xn_nhwc[..., i * cd:(i + 1) * cd]
        if i == 0:
            s = dwconv3x3(xi, p["mfr_w"][0], p["mfr_b"][0])
        else:
            k = 2 ** i
            # adaptive_max_pool2d with exact divisor == k x k max pool (JAX glue)
            s = xi.reshape(N, H // k, k, W // k, k, cd).max(axis=(2, 4))
            s = dwconv3x3(s, p["mfr_w"][i], p["mfr_b"][i])
            # F.interpolate(mode='nearest') with exact factor == repeat (JAX glue)
            s = jnp.repeat(jnp.repeat(s, k, axis=1), k, axis=2)
        outs.append(s)
    return jnp.concatenate(outs, axis=-1)


def attblock_forward(p, x):
    """AttBlock: x = SAFM(LN1(x)) + x ; x = CCM(LN2(x)) + x."""
    N, H, W, C = x.shape
    P = N * H * W
    kp, cp = _pack_geom(C)

    x_pk = _pack_rows(x.reshape(P, C), kp, cp)
    xn1_pk = layernorm_packed(x_pk, p["norm1_w"], p["norm1_b"], C, kp, cp)
    xn1 = _unpack_rows(xn1_pk, P, C, kp, cp).reshape(N, H, W, C)

    s_cat = safm_multiscale(p["safm"], xn1)
    s_pk = _pack_rows(s_cat.reshape(P, C), kp, cp)

    # aggr 1x1 -> GELU -> * LN1(x) -> + x   (one fused lane-dense kernel)
    x1_pk = safm_aggr_packed(s_pk, xn1_pk, x_pk,
                             p["safm"]["aggr_w"], p["safm"]["aggr_b"], C, kp, cp)
    x1 = _unpack_rows(x1_pk, P, C, kp, cp).reshape(N, H, W, C)

    # CCM with fused LN2 / conv3x3 / GELU / conv1x1 / +residual (one kernel)
    x2 = conv3x3_rows(x1, p["ccm1_w"], p["ccm1_b"],
                      ln_w=p["norm2_w"], ln_b=p["norm2_b"], act="gelu",
                      w2=p["ccm2_w"], b2=p["ccm2_b"], residual=True)
    return x2


def freq_forward(p, x):
    """FreqFeature: rfft2 -> FreBlock (fused mag/pha MLPs + polar) -> irfft2."""
    N, H, W, C = x.shape
    kp, cp = _pack_geom(C)
    # TODO(synk): FFT has no Pallas primitive; rfft2/irfft2 stay in plain JAX.
    xf = jnp.fft.rfft2(x, axes=(1, 2))                 # (N, H, W//2+1, C) complex64
    Wf = xf.shape[2]
    Pf = N * H * Wf
    # TODO(synk): fold abs/angle into the kernel (mag=sqrt(re^2+im^2),
    # pha=atan2(im,re)) once Mosaic atan2 lowering is confirmed.
    mag_pk = _pack_rows(jnp.abs(xf).reshape(Pf, C), kp, cp)
    pha_pk = _pack_rows(jnp.angle(xf).reshape(Pf, C), kp, cp)
    re_pk, im_pk = freblock_packed(mag_pk, pha_pk, p, C, kp, cp)
    re = _unpack_rows(re_pk, Pf, C, kp, cp).reshape(N, H, Wf, C)
    im = _unpack_rows(im_pk, Pf, C, kp, cp).reshape(N, H, Wf, C)
    return jnp.fft.irfft2(jax.lax.complex(re, im), s=(H, W), axes=(1, 2))


def safmn_fft_s_forward(params, x_nchw, layers=(1, 8)):
    """Full SAFMN_FFT_S forward. Input/outputs in NCHW (PyTorch convention)."""
    x = jnp.transpose(x_nchw, (0, 2, 3, 1)).astype(jnp.float32)      # -> NHWC
    x = conv3x3_rows(x, params["to_feat_w"], params["to_feat_b"])
    N, H, W, C = x.shape
    P = N * H * W
    kp, cp = _pack_geom(C)

    out_features = []
    layer_num = 1
    for blk in params["blocks"]:
        spatial = attblock_forward(blk["att"], x)
        if layer_num in layers:
            out_features.append(jnp.transpose(x, (0, 3, 1, 2)))       # NCHW
        freq = freq_forward(blk["freq"], x)
        sp_pk = _pack_rows(spatial.reshape(P, C), kp, cp)
        fr_pk = _pack_rows(freq.reshape(P, C), kp, cp)
        x_pk = fuse_packed(sp_pk, fr_pk, blk["fuse_w"], blk["fuse_b"], C, kp, cp)
        x = _unpack_rows(x_pk, P, C, kp, cp).reshape(N, H, W, C)
        layer_num += 1

    # to_img: 3x3 conv -> PixelShuffle(r)
    y = conv3x3_rows(x, params["to_img_w"], params["to_img_b"])       # (N,H,W,Cout*r*r)
    N, H, W, Crr = y.shape
    r = params["upscale"]
    Cout = Crr // (r * r)
    y = jnp.transpose(y, (0, 3, 1, 2))                                # NCHW
    y = y.reshape(N, Cout, r, r, H, W)
    y = jnp.transpose(y, (0, 1, 4, 2, 5, 3)).reshape(N, Cout, H * r, W * r)
    return y, out_features


# ----------------------------------------------------------------------------
# deterministic parameter construction (synthetic weights, torch shapes)
# ----------------------------------------------------------------------------
def init_params(key, in_chans=3, dim=12, n_blocks=2, ffn_scale=2.0, upscale=4):
    hidden = int(dim * ffn_scale)
    cd = dim // 3
    keys = iter(jax.random.split(key, 512))

    def conv_w(co, ci, k):
        fan_in = ci * k * k
        return jax.random.normal(next(keys), (co, ci, k, k), jnp.float32) / jnp.sqrt(fan_in)

    def bias(co):
        return jax.random.normal(next(keys), (co,), jnp.float32) * 0.01

    blocks = []
    for _ in range(n_blocks):
        att = dict(
            norm1_w=jnp.ones((dim,), jnp.float32), norm1_b=jnp.zeros((dim,), jnp.float32),
            norm2_w=jnp.ones((dim,), jnp.float32), norm2_b=jnp.zeros((dim,), jnp.float32),
            safm=dict(
                mfr_w=[conv_w(cd, 1, 3) for _ in range(3)],
                mfr_b=[bias(cd) for _ in range(3)],
                aggr_w=conv_w(dim, dim, 1), aggr_b=bias(dim),
            ),
            ccm1_w=conv_w(hidden, dim, 3), ccm1_b=bias(hidden),
            ccm2_w=conv_w(dim, hidden, 1), ccm2_b=bias(dim),
        )
        freq = dict(
            mag1_w=conv_w(dim // 2, dim, 1), mag1_b=bias(dim // 2),
            mag2_w=conv_w(dim, dim // 2, 1), mag2_b=bias(dim),
            pha1_w=conv_w(dim // 2, dim, 1), pha1_b=bias(dim // 2),
            pha2_w=conv_w(dim, dim // 2, 1), pha2_b=bias(dim),
        )
        blocks.append(dict(att=att, freq=freq,
                           fuse_w=conv_w(dim, 2 * dim, 1), fuse_b=bias(dim)))

    return dict(
        to_feat_w=conv_w(dim, in_chans, 3), to_feat_b=bias(dim),
        to_img_w=conv_w(in_chans * upscale ** 2, dim, 3), to_img_b=bias(in_chans * upscale ** 2),
        blocks=blocks,
        upscale=upscale,
    )


# ----------------------------------------------------------------------------
if __name__ == "__main__":
    key = jax.random.PRNGKey(0)
    k_param, k_x = jax.random.split(key)

    in_chans, dim, n_blocks, upscale = 3, 12, 2, 4
    params = init_params(k_param, in_chans=in_chans, dim=dim,
                         n_blocks=n_blocks, ffn_scale=2.0, upscale=upscale)

    x = jax.random.normal(k_x, (2, in_chans, 16, 16), jnp.float32)    # NCHW like PyTorch

    y, out_feats = safmn_fft_s_forward(params, x, layers=(1, 2))
    y = jax.block_until_ready(y)
    out_feats = [jax.block_until_ready(f) for f in out_feats]

    assert y.shape == (2, in_chans, 16 * upscale, 16 * upscale)
    assert len(out_feats) == 2 and all(f.shape == (2, dim, 16, 16) for f in out_feats)
    assert bool(jnp.all(jnp.isfinite(y)))
    print("KERNEL_OK")
</pallas_src>

<mosaic_0001>
module attributes {stable_mosaic.version = 11 : i64} {
  func.func @kernel(%arg0: i32, %arg1: i32, %arg2: memref<1x1x18x3xf32, #tpu.memory_space<vmem>>, %arg3: memref<1x1x18x3xf32, #tpu.memory_space<vmem>>, %arg4: memref<1x1x18x3xf32, #tpu.memory_space<vmem>>, %arg5: memref<27x12xf32, #tpu.memory_space<vmem>>, %arg6: memref<1x12xf32, #tpu.memory_space<vmem>>, %arg7: memref<1x1x16x12xf32, #tpu.memory_space<vmem>>) attributes {dimension_semantics = [#tpu.dimension_semantics<parallel>, #tpu.dimension_semantics<parallel>], iteration_bounds = array<i64: 2, 16>, scalar_prefetch = 0 : i64, scratch_operands = 0 : i64, tpu.core_type = #tpu.core_type<tc>, window_params = [{transform_indices = @transform_0, window_bounds = array<i64: 1, 1, 18, 3>}, {transform_indices = @transform_1, window_bounds = array<i64: 1, 1, 18, 3>}, {transform_indices = @transform_2, window_bounds = array<i64: 1, 1, 18, 3>}, {pipeline_mode = #tpu.pipeline_mode<synchronous>, transform_indices = @transform_3, window_bounds = array<i64: 27, 12>}, {pipeline_mode = #tpu.pipeline_mode<synchronous>, transform_indices = @transform_4, window_bounds = array<i64: 1, 12>}, {transform_indices = @transform_5, window_bounds = array<i64: 1, 1, 16, 12>}]} {
    %c0 = arith.constant 0 : index
    %c0_0 = arith.constant 0 : index
    %c0_1 = arith.constant 0 : index
    %c0_2 = arith.constant 0 : index
    %0 = vector.load %arg2[%c0, %c0_0, %c0_1, %c0_2] : memref<1x1x18x3xf32, #tpu.memory_space<vmem>>, vector<1x1x18x3xf32>
    %1 = vector.shape_cast %0 : vector<1x1x18x3xf32> to vector<18x3xf32>
    %c0_3 = arith.constant 0 : index
    %c0_4 = arith.constant 0 : index
    %c0_5 = arith.constant 0 : index
    %c0_6 = arith.constant 0 : index
    %2 = vector.load %arg3[%c0_3, %c0_4, %c0_5, %c0_6] : memref<1x1x18x3xf32, #tpu.memory_space<vmem>>, vector<1x1x18x3xf32>
    %3 = vector.shape_cast %2 : vector<1x1x18x3xf32> to vector<18x3xf32>
    %c0_7 = arith.constant 0 : index
    %c0_8 = arith.constant 0 : index
    %c0_9 = arith.constant 0 : index
    %c0_10 = arith.constant 0 : index
    %4 = vector.load %arg4[%c0_7, %c0_8, %c0_9, %c0_10] : memref<1x1x18x3xf32, #tpu.memory_space<vmem>>, vector<1x1x18x3xf32>
    %5 = vector.shape_cast %4 : vector<1x1x18x3xf32> to vector<18x3xf32>
    %c0_11 = arith.constant 0 : index
    %c0_12 = arith.constant 0 : index
    %6 = vector.load %arg5[%c0_11, %c0_12] : memref<27x12xf32, #tpu.memory_space<vmem>>, vector<27x12xf32>
    %cst = arith.constant 0.000000e+00 : f32
    %7 = vector.broadcast %cst : f32 to vector<16x12xf32>
    %8 = vector.extract_strided_slice %1 {offsets = [0, 0], sizes = [16, 3], strides = [1, 1]} : vector<18x3xf32> to vector<16x3xf32>
    %9 = vector.extract_strided_slice %6 {offsets = [0, 0], sizes = [3, 12], strides = [1, 1]} : vector<27x12xf32> to vector<3x12xf32>
    %cst_13 = arith.constant dense<0.000000e+00> : vector<16x12xf32>
    %10 = tpu.matmul %8, %9, %cst_13 {dimension_numbers = #tpu.dot_dimension_numbers<[1], [0], [0], [1], [0, 0, 1, 1], [], []>} : vector<16x3xf32>, vector<3x12xf32>, vector<16x12xf32> -> vector<16x12xf32>
    %11 = arith.addf %7, %10 : vector<16x12xf32>
    %12 = vector.extract_strided_slice %1 {offsets = [1, 0], sizes = [16, 3], strides = [1, 1]} : vector<18x3xf32> to vector<16x3xf32>
    %13 = vector.extract_strided_slice %6 {offsets = [3, 0], sizes = [3, 12], strides = [1, 1]} : vector<27x12xf32> to vector<3x12xf32>
    %cst_14 = arith.constant dense<0.000000e+00> : vector<16x12xf32>
    %14 = tpu.matmul %12, %13, %cst_14 {dimension_numbers = #tpu.dot_dimension_numbers<[1], [0], [0], [1], [0, 0, 1, 1], [], []>} : vector<16x3xf32>, vector<3x12xf32>, vector<16x12xf32> -> vector<16x12xf32>
    %15 = arith.addf %11, %14 : vector<16x12xf32>
    %16 = vector.extract_strided_slice %1 {offsets = [2, 0], sizes = [16, 3], strides = [1, 1]} : vector<18x3xf32> to vector<16x3xf32>
    %17 = vector.extract_strided_slice %6 {offsets = [6, 0], sizes = [3, 12], strides = [1, 1]} : vector<27x12xf32> to vector<3x12xf32>
    %cst_15 = arith.constant dense<0.000000e+00> : vector<16x12xf32>
    %18 = tpu.matmul %16, %17, %cst_15 {dimension_numbers = #tpu.dot_dimension_numbers<[1], [0], [0], [1], [0, 0, 1, 1], [], []>} : vector<16x3xf32>, vector<3x12xf32>, vector<16x12xf32> -> vector<16x12xf32>
    %19 = arith.addf %15, %18 : vector<16x12xf32>
    %20 = vector.extract_strided_slice %3 {offsets = [0, 0], sizes = [16, 3], strides = [1, 1]} : vector<18x3xf32> to vector<16x3xf32>
    %21 = vector.extract_strided_slice %6 {offsets = [9, 0], sizes = [3, 12], strides = [1, 1]} : vector<27x12xf32> to vector<3x12xf32>
    %cst_16 = arith.constant dense<0.000000e+00> : vector<16x12xf32>
    %22 = tpu.matmul %20, %21, %cst_16 {dimension_numbers = #tpu.dot_dimension_numbers<[1], [0], [0], [1], [0, 0, 1, 1], [], []>} : vector<16x3xf32>, vector<3x12xf32>, vector<16x12xf32> -> vector<16x12xf32>
    %23 = arith.addf %19, %22 : vector<16x12xf32>
    %24 = vector.extract_strided_slice %3 {offsets = [1, 0], sizes = [16, 3], strides = [1, 1]} : vector<18x3xf32> to vector<16x3xf32>
    %25 = vector.extract_strided_slice %6 {offsets = [12, 0], sizes = [3, 12], strides = [1, 1]} : vector<27x12xf32> to vector<3x12xf32>
    %cst_17 = arith.constant dense<0.000000e+00> : vector<16x12xf32>
    %26 = tpu.matmul %24, %25, %cst_17 {dimension_numbers = #tpu.dot_dimension_numbers<[1], [0], [0], [1], [0, 0, 1, 1], [], []>} : vector<16x3xf32>, vector<3x12xf32>, vector<16x12xf32> -> vector<16x12xf32>
    %27 = arith.addf %23, %26 : vector<16x12xf32>
    %28 = vector.extract_strided_slice %3 {offsets = [2, 0], sizes = [16, 3], strides = [1, 1]} : vector<18x3xf32> to vector<16x3xf32>
    %29 = vector.extract_strided_slice %6 {offsets = [15, 0], sizes = [3, 12], strides = [1, 1]} : vector<27x12xf32> to vector<3x12xf32>
    %cst_18 = arith.constant dense<0.000000e+00> : vector<16x12xf32>
    %30 = tpu.matmul %28, %29, %cst_18 {dimension_numbers = #tpu.dot_dimension_numbers<[1], [0], [0], [1], [0, 0, 1, 1], [], []>} : vector<16x3xf32>, vector<3x12xf32>, vector<16x12xf32> -> vector<16x12xf32>
    %31 = arith.addf %27, %30 : vector<16x12xf32>
    %32 = vector.extract_strided_slice %5 {offsets = [0, 0], sizes = [16, 3], strides = [1, 1]} : vector<18x3xf32> to vector<16x3xf32>
    %33 = vector.extract_strided_slice %6 {offsets = [18, 0], sizes = [3, 12], strides = [1, 1]} : vector<27x12xf32> to vector<3x12xf32>
    %cst_19 = arith.constant dense<0.000000e+00> : vector<16x12xf32>
    %34 = tpu.matmul %32, %33, %cst_19 {dimension_numbers = #tpu.dot_dimension_numbers<[1], [0], [0], [1], [0, 0, 1, 1], [], []>} : vector<16x3xf32>, vector<3x12xf32>, vector<16x12xf32> -> vector<16x12xf32>
    %35 = arith.addf %31, %34 : vector<16x12xf32>
    %36 = vector.extract_strided_slice %5 {offsets = [1, 0], sizes = [16, 3], strides = [1, 1]} : vector<18x3xf32> to vector<16x3xf32>
    %37 = vector.extract_strided_slice %6 {offsets = [21, 0], sizes = [3, 12], strides = [1, 1]} : vector<27x12xf32> to vector<3x12xf32>
    %cst_20 = arith.constant dense<0.000000e+00> : vector<16x12xf32>
    %38 = tpu.matmul %36, %37, %cst_20 {dimension_numbers = #tpu.dot_dimension_numbers<[1], [0], [0], [1], [0, 0, 1, 1], [], []>} : vector<16x3xf32>, vector<3x12xf32>, vector<16x12xf32> -> vector<16x12xf32>
    %39 = arith.addf %35, %38 : vector<16x12xf32>
    %40 = vector.extract_strided_slice %5 {offsets = [2, 0], sizes = [16, 3], strides = [1, 1]} : vector<18x3xf32> to vector<16x3xf32>
    %41 = vector.extract_strided_slice %6 {offsets = [24, 0], sizes = [3, 12], strides = [1, 1]} : vector<27x12xf32> to vector<3x12xf32>
    %cst_21 = arith.constant dense<0.000000e+00> : vector<16x12xf32>
    %42 = tpu.matmul %40, %41, %cst_21 {dimension_numbers = #tpu.dot_dimension_numbers<[1], [0], [0], [1], [0, 0, 1, 1], [], []>} : vector<16x3xf32>, vector<3x12xf32>, vector<16x12xf32> -> vector<16x12xf32>
    %43 = arith.addf %39, %42 : vector<16x12xf32>
    %c0_22 = arith.constant 0 : index
    %c0_23 = arith.constant 0 : index
    %44 = vector.load %arg6[%c0_22, %c0_23] : memref<1x12xf32, #tpu.memory_space<vmem>>, vector<1x12xf32>
    %45 = vector.broadcast %44 : vector<1x12xf32> to vector<16x12xf32>
    %46 = arith.addf %43, %45 : vector<16x12xf32>
    %47 = vector.shape_cast %46 : vector<16x12xf32> to vector<1x1x16x12xf32>
    %c0_24 = arith.constant 0 : index
    %c0_25 = arith.constant 0 : index
    %c0_26 = arith.constant 0 : index
    %c0_27 = arith.constant 0 : index
    %48 = vector.load %arg7[%c0_24, %c0_25, %c0_26, %c0_27] : memref<1x1x16x12xf32, #tpu.memory_space<vmem>>, vector<1x1x16x12xf32>
    tpu.vector_store %arg7[%c0_24, %c0_25, %c0_26, %c0_27], %47 {strides = array<i32>} : memref<1x1x16x12xf32, #tpu.memory_space<vmem>>, vector<1x1x16x12xf32>,
    return
  }
  func.func @transform_0(%arg0: i32, %arg1: i32) -> (i32, i32, i32, i32) {
    %c0_i32 = arith.constant 0 : i32
    %0 = arith.addi %arg1, %c0_i32 : i32
    %c0_i32_0 = arith.constant 0 : i32
    %c0_i32_1 = arith.constant 0 : i32
    %c0_i32_2 = arith.constant 0 : i32
    return %arg0, %0, %c0_i32_0, %c0_i32_1 : i32, i32, i32, i32
  }
  func.func @transform_1(%arg0: i32, %arg1: i32) -> (i32, i32, i32, i32) {
    %c1_i32 = arith.constant 1 : i32
    %0 = arith.addi %arg1, %c1_i32 : i32
    %c0_i32 = arith.constant 0 : i32
    %c0_i32_0 = arith.constant 0 : i32
    %c0_i32_1 = arith.constant 0 : i32
    return %arg0, %0, %c0_i32, %c0_i32_0 : i32, i32, i32, i32
  }
  func.func @transform_2(%arg0: i32, %arg1: i32) -> (i32, i32, i32, i32) {
    %c2_i32 = arith.constant 2 : i32
    %0 = arith.addi %arg1, %c2_i32 : i32
    %c0_i32 = arith.constant 0 : i32
    %c0_i32_0 = arith.constant 0 : i32
    %c0_i32_1 = arith.constant 0 : i32
    return %arg0, %0, %c0_i32, %c0_i32_0 : i32, i32, i32, i32
  }
  func.func @transform_3(%arg0: i32, %arg1: i32) -> (i32, i32) {
    %c0_i32 = arith.constant 0 : i32
    %c0_i32_0 = arith.constant 0 : i32
    %c0_i32_1 = arith.constant 0 : i32
    return %c0_i32, %c0_i32_0 : i32, i32
  }
  func.func @transform_4(%arg0: i32, %arg1: i32) -> (i32, i32) {
    %c0_i32 = arith.constant 0 : i32
    %c0_i32_0 = arith.constant 0 : i32
    %c0_i32_1 = arith.constant 0 : i32
    return %c0_i32, %c0_i32_0 : i32, i32
  }
  func.func @transform_5(%arg0: i32, %arg1: i32) -> (i32, i32, i32, i32) {
    %c0_i32 = arith.constant 0 : i32
    %c0_i32_0 = arith.constant 0 : i32
    %c0_i32_1 = arith.constant 0 : i32
    return %arg0, %arg1, %c0_i32, %c0_i32_0 : i32, i32, i32, i32
  }
}

</mosaic_0001>

<llo_original>
// kernel: tpu_custom_call.1
$region0: #{tpu_custom_call.1}
  #allocation0 [shape = 'u32[]', space=smem, size = 0x4, offset = 0x4, fixed_abs, tag = 'smem constant byte address 0x4 - core index']
  #allocation1 [shape = 'u32[144,128]{1,0:T(1,128)}', space=vmem, size = 0x12000, scoped, tag = 'internal scratch']
  %s0 = inlined_call_operand.vmem [shape: f32[2,18,18,3], index: 0, kind: input, shape index: {}]
  %s1 = inlined_call_operand.vmem [shape: f32[2,18,18,3], index: 1, kind: input, shape index: {}]
  %s2 = inlined_call_operand.vmem [shape: f32[2,18,18,3], index: 2, kind: input, shape index: {}]
  %s3 = inlined_call_operand.vmem [shape: f32[27,12], index: 3, kind: input, shape index: {}]
  %s4 = inlined_call_operand.vmem [shape: f32[1,12], index: 4, kind: input, shape index: {}]
  %s5 = inlined_call_operand.vmem [shape: f32[2,16,16,12], index: 5, kind: output, shape index: {}]
  %s6 = sld [smem:[#allocation0]]
  $region53: #{tpu_custom_call.1} parent=0
    _
  %s8 = ssub.s32 1, %s6
  %s9 = scalar_select 0, %s8, %s6
  loop: start=0, step=1, limit=34
  $region2: #{tpu_custom_call.1} parent=0 // loop_pre_header
    _
  $region3: #{tpu_custom_call.1} parent=0 // loop_header
    %s11 = sphi 0, %s15
    %p12 = scmp.ge.s32.totalorder %s11, 34
    %s18 = sphi 0, %s30
    %s19 = sphi 0, %s26
    %s20 = sphi 0, %s18
    %s21 = sphi 0, %s19
    %s22 = sphi 0, %s20
    %s23 = sphi 0, %s21
    %s35 = sphi 0, %s37
    %s38 = sphi 0, %s35
    %s39 = sphi 0, %s38
    %s55 = sphi 0, %s39
    %s65 = sphi 0, %s67
    %s68 = sphi 0, %s65
    %s69 = sphi 0, %s68
    %s85 = sphi 0, %s69
    %s95 = sphi 0, %s97
    %s98 = sphi 0, %s95
    %s99 = sphi 0, %s98
    %s115 = sphi 0, %s99
    %s119 = sphi 0, %s119
    %s121 = sphi 0, %s119
    %s122 = sphi 0, %s121
    %s136 = sphi 0, %s122
    %s140 = sphi 0, %s140
    %s142 = sphi 0, %s140
    %s143 = sphi 0, %s142
    %s157 = sphi 0, %s143
    %s165 = sphi 0, %s167
    %s168 = sphi 0, %s165
    %s169 = sphi 0, %s168
    %s185 = sphi 0, %s169
  $region4: #{tpu_custom_call.1} parent=0 // loop_header_branch
    %14 = sbr.rel (%p12) target = $region8
  $region5: #{tpu_custom_call.1} parent=0 // loop_body
    %s16 = ssub.s32 %s11, 1
    %s17 = ssub.s32 %s11, 2
    %s24 = sadd.s32 1, %s19
    %p25 = scmp.ge.s32.totalorder %s24, 16
    %s26 = scalar_select %p25, 0, %s24
    %s27 = sadd.s32 1, %s18
    %s28 = scalar_select %p25, %s27, %s18
    %p29 = scmp.ge.s32.totalorder %s28, 2
    %s30 = scalar_select %p29, 0, %s28
    %s31 = ssub.s32 %s18, %s30
    %s32 = ssub.s32 %s19, %s26
    %s33 = sor.u32 %s31, %s32
    %p34 = scmp.eq.s32.totalorder %s33, 0
    %s36 = sadd.s32 %s35, 1
    %s37 = scalar_select %p34, %s35, %s36
    %p40 = pneg %p34
    %p41 = scmp.eq.s32.totalorder %s11, 31
    %p42 = por %p40, %p41
    %p43 = scmp.ne.s32.totalorder %s35, %s38
    %p44 = scmp.eq.s32.totalorder %s11, 0
    %p45 = por %p43, %p44
    %p46 = scmp.ne.s32.totalorder %s35, %s38
    %p47 = scmp.eq.s32.totalorder %s16, 31
    %p48 = por %p46, %p47
    %p49 = scmp.ne.s32.totalorder %s38, %s39
    %p50 = scmp.eq.s32.totalorder %s16, 0
    %p51 = por %p49, %p50
    %p52 = scmp.ne.s32.totalorder %s38, %s39
    %p53 = scmp.eq.s32.totalorder %s17, 31
    %p54 = por %p52, %p53
    %p56 = scmp.ne.s32.totalorder %s39, %s55
    %p57 = scmp.eq.s32.totalorder %s17, 0
    %p58 = por %p56, %p57
    %s59 = sadd.s32 %s19, 1
    %s60 = sadd.s32 %s26, 1
    %s61 = ssub.s32 %s18, %s30
    %s62 = ssub.s32 %s59, %s60
    %s63 = sor.u32 %s61, %s62
    %p64 = scmp.eq.s32.totalorder %s63, 0
    %s66 = sadd.s32 %s65, 1
    %s67 = scalar_select %p64, %s65, %s66
    %p70 = pneg %p64
    %p71 = scmp.eq.s32.totalorder %s11, 31
    %p72 = por %p70, %p71
    %p73 = scmp.ne.s32.totalorder %s65, %s68
    %p74 = scmp.eq.s32.totalorder %s11, 0
    %p75 = por %p73, %p74
    %p76 = scmp.ne.s32.totalorder %s65, %s68
    %p77 = scmp.eq.s32.totalorder %s16, 31
    %p78 = por %p76, %p77
    %p79 = scmp.ne.s32.totalorder %s68, %s69
    %p80 = scmp.eq.s32.totalorder %s16, 0
    %p81 = por %p79, %p80
    %p82 = scmp.ne.s32.totalorder %s68, %s69
    %p83 = scmp.eq.s32.totalorder %s17, 31
    %p84 = por %p82, %p83
    %p86 = scmp.ne.s32.totalorder %s69, %s85
    %p87 = scmp.eq.s32.totalorder %s17, 0
    %p88 = por %p86, %p87
    %s89 = sadd.s32 %s19, 2
    %s90 = sadd.s32 %s26, 2
    %s91 = ssub.s32 %s18, %s30
    %s92 = ssub.s32 %s89, %s90
    %s93 = sor.u32 %s91, %s92
    %p94 = scmp.eq.s32.totalorder %s93, 0
    %s96 = sadd.s32 %s95, 1
    %s97 = scalar_select %p94, %s95, %s96
    %p100 = pneg %p94
    %p101 = scmp.eq.s32.totalorder %s11, 31
    %p102 = por %p100, %p101
    %p103 = scmp.ne.s32.totalorder %s95, %s98
    %p104 = scmp.eq.s32.totalorder %s11, 0
    %p105 = por %p103, %p104
    %p106 = scmp.ne.s32.totalorder %s95, %s98
    %p107 = scmp.eq.s32.totalorder %s16, 31
    %p108 = por %p106, %p107
    %p109 = scmp.ne.s32.totalorder %s98, %s99
    %p110 = scmp.eq.s32.totalorder %s16, 0
    %p111 = por %p109, %p110
    %p112 = scmp.ne.s32.totalorder %s98, %s99
    %p113 = scmp.eq.s32.totalorder %s17, 31
    %p114 = por %p112, %p113
    %p116 = scmp.ne.s32.totalorder %s99, %s115
    %p117 = scmp.eq.s32.totalorder %s17, 0
    %p118 = por %p116, %p117
    %s120 = sadd.s32 %s119, 1
    %p123 = scmp.eq.s32.totalorder %s11, 31
    %p124 = scmp.ne.s32.totalorder %s119, %s121
    %p125 = scmp.eq.s32.totalorder %s11, 0
    %p126 = por %p124, %p125
    %p127 = scmp.ne.s32.totalorder %s119, %s121
    %p128 = scmp.eq.s32.totalorder %s16, 31
    %p129 = por %p127, %p128
    %p130 = scmp.ne.s32.totalorder %s121, %s122
    %p131 = scmp.eq.s32.totalorder %s16, 0
    %p132 = por %p130, %p131
    %p133 = scmp.ne.s32.totalorder %s121, %s122
    %p134 = scmp.eq.s32.totalorder %s17, 31
    %p135 = por %p133, %p134
    %p137 = scmp.ne.s32.totalorder %s122, %s136
    %p138 = scmp.eq.s32.totalorder %s17, 0
    %p139 = por %p137, %p138
    %s141 = sadd.s32 %s140, 1
    %p144 = scmp.eq.s32.totalorder %s11, 31
    %p145 = scmp.ne.s32.totalorder %s140, %s142
    %p146 = scmp.eq.s32.totalorder %s11, 0
    %p147 = por %p145, %p146
    %p148 = scmp.ne.s32.totalorder %s140, %s142
    %p149 = scmp.eq.s32.totalorder %s16, 31
    %p150 = por %p148, %p149
    %p151 = scmp.ne.s32.totalorder %s142, %s143
    %p152 = scmp.eq.s32.totalorder %s16, 0
    %p153 = por %p151, %p152
    %p154 = scmp.ne.s32.totalorder %s142, %s143
    %p155 = scmp.eq.s32.totalorder %s17, 31
    %p156 = por %p154, %p155
    %p158 = scmp.ne.s32.totalorder %s143, %s157
    %p159 = scmp.eq.s32.totalorder %s17, 0
    %p160 = por %p158, %p159
    %s161 = ssub.s32 %s18, %s30
    %s162 = ssub.s32 %s19, %s26
    %s163 = sor.u32 %s161, %s162
    %p164 = scmp.eq.s32.totalorder %s163, 0
    %s166 = sadd.s32 %s165, 1
    %s167 = scalar_select %p164, %s165, %s166
    %p170 = pneg %p164
    %p171 = scmp.eq.s32.totalorder %s11, 31
    %p172 = por %p170, %p171
    %p173 = scmp.ne.s32.totalorder %s165, %s168
    %p174 = scmp.eq.s32.totalorder %s11, 0
    %p175 = por %p173, %p174
    %p176 = scmp.ne.s32.totalorder %s165, %s168
    %p177 = scmp.eq.s32.totalorder %s16, 31
    %p178 = por %p176, %p177
    %p179 = scmp.ne.s32.totalorder %s168, %s169
    %p180 = scmp.eq.s32.totalorder %s16, 0
    %p181 = por %p179, %p180
    %p182 = scmp.ne.s32.totalorder %s168, %s169
    %p183 = scmp.eq.s32.totalorder %s17, 31
    %p184 = por %p182, %p183
    %p186 = scmp.ne.s32.totalorder %s169, %s185
    %p187 = scmp.eq.s32.totalorder %s17, 0
    %p188 = por %p186, %p187
    %p189 = scmp.le.s32.totalorder 1, %s11
    %p190 = scmp.lt.s32.totalorder %s11, 33
    %p191 = pnand %p189, %p190
    %p192 = pneg %p191
    // Predicated region
    $region9: #{tpu_custom_call.1} parent=5 // pred_check
      _
    $region10: #{tpu_custom_call.1} parent=5 // pred_check_branch
      %194 = sbr.rel (%p191) target = $region12
    $region11: #{tpu_custom_call.1} parent=5 // pred_region
      %s195 = ssub.s32 %s11, 1
      // Predicated region
      $region13: #{tpu_custom_call.1} parent=11 // pred_check
        %p196 = pneg %p132
      $region14: #{tpu_custom_call.1} parent=11 // pred_check_branch
        %198 = sbr.rel (%p196) target = $region16
      $region15: #{tpu_custom_call.1} parent=11 // pred_region
        _
      $region16: #{tpu_custom_call.1} parent=11 // pred_fallthru
        _
      // Predicated region
      $region17: #{tpu_custom_call.1} parent=11 // pred_check
        %p199 = pneg %p153
      $region18: #{tpu_custom_call.1} parent=11 // pred_check_branch
        %201 = sbr.rel (%p199) target = $region20
      $region19: #{tpu_custom_call.1} parent=11 // pred_region
        _
      $region20: #{tpu_custom_call.1} parent=11 // pred_fallthru
        _
    $region12: #{tpu_custom_call.1} parent=5 // pred_fallthru
      _
    %p202 = scmp.lt.s32.totalorder %s11, 32
    // Predicated region
    $region21: #{tpu_custom_call.1} parent=5 // pred_check
      %p203 = pneg %p202
    $region22: #{tpu_custom_call.1} parent=5 // pred_check_branch
      %205 = sbr.rel (%p203) target = $region24
    $region23: #{tpu_custom_call.1} parent=5 // pred_region
      // Predicated region
      $region25: #{tpu_custom_call.1} parent=23 // pred_check
        %p206 = pneg %p45
      $region26: #{tpu_custom_call.1} parent=23 // pred_check_branch
        %208 = sbr.rel (%p206) target = $region28
      $region27: #{tpu_custom_call.1} parent=23 // pred_region
        %p209 = scmp.lt.s32.totalorder %s18, 1
        %s210 = scalar_select %p209, %s18, 1
        %p211 = scmp.lt.s32.totalorder %s19, 17
        %s212 = scalar_select %p211, %s19, 17
        %s213 = smul.addr %s212, 3
        %s214 = smul.addr %s210, 54
        %s215 = sadd.s32 %s213, %s214
        %s216 = smul.addr %s215, 8
        %s217 = scalar_lea.vmem %s0, %s216
      $region28: #{tpu_custom_call.1} parent=23 // pred_fallthru
        _
      // Predicated region
      $region29: #{tpu_custom_call.1} parent=23 // pred_check
        %p218 = pneg %p75
      $region30: #{tpu_custom_call.1} parent=23 // pred_check_branch
        %220 = sbr.rel (%p218) target = $region32
      $region31: #{tpu_custom_call.1} parent=23 // pred_region
        %s221 = sadd.s32 %s19, 1
        %p222 = scmp.lt.s32.totalorder %s18, 1
        %s223 = scalar_select %p222, %s18, 1
        %p224 = scmp.lt.s32.totalorder %s221, 17
        %s225 = scalar_select %p224, %s221, 17
        %s226 = smul.addr %s225, 3
        %s227 = smul.addr %s223, 54
        %s228 = sadd.s32 %s226, %s227
        %s229 = smul.addr %s228, 8
        %s230 = scalar_lea.vmem %s1, %s229
        %s231 = sadd.s32 %s19, 1
      $region32: #{tpu_custom_call.1} parent=23 // pred_fallthru
        _
      // Predicated region
      $region33: #{tpu_custom_call.1} parent=23 // pred_check
        %p232 = pneg %p105
      $region34: #{tpu_custom_call.1} parent=23 // pred_check_branch
        %234 = sbr.rel (%p232) target = $region36
      $region35: #{tpu_custom_call.1} parent=23 // pred_region
        %s235 = sadd.s32 %s19, 2
        %p236 = scmp.lt.s32.totalorder %s18, 1
        %s237 = scalar_select %p236, %s18, 1
        %p238 = scmp.lt.s32.totalorder %s235, 17
        %s239 = scalar_select %p238, %s235, 17
        %s240 = smul.addr %s239, 3
        %s241 = smul.addr %s237, 54
        %s242 = sadd.s32 %s240, %s241
        %s243 = smul.addr %s242, 8
        %s244 = scalar_lea.vmem %s2, %s243
        %s245 = sadd.s32 %s19, 2
      $region36: #{tpu_custom_call.1} parent=23 // pred_fallthru
        _
    $region24: #{tpu_custom_call.1} parent=5 // pred_fallthru
      _
    %p246 = scmp.le.s32.totalorder 1, %s11
    %p247 = scmp.lt.s32.totalorder %s11, 33
    %p248 = pnand %p246, %p247
    %p249 = pneg %p248
    // Predicated region
    $region37: #{tpu_custom_call.1} parent=5 // pred_check
      _
    $region38: #{tpu_custom_call.1} parent=5 // pred_check_branch
      %251 = sbr.rel (%p248) target = $region40
    $region39: #{tpu_custom_call.1} parent=5 // pred_region
      %s252 = ssub.s32 %s11, 1
      %p253 = scmp.lt.s32.totalorder %s20, 1
      %s254 = scalar_select %p253, %s20, 1
      %p255 = scmp.lt.s32.totalorder %s21, 17
      %s256 = scalar_select %p255, %s21, 17
      %s257 = smul.addr %s256, 3
      %s258 = smul.addr %s254, 54
      %s259 = sadd.s32 %s257, %s258
      %s260 = smul.addr %s259, 8
      %s261 = scalar_lea.vmem %s0, %s260
      %p262 = pneg %p51
      %p263 = pneg %p48
      %s264 = sadd.s32 %s21, 1
      %p265 = scmp.lt.s32.totalorder %s20, 1
      %s266 = scalar_select %p265, %s20, 1
      %p267 = scmp.lt.s32.totalorder %s264, 17
      %s268 = scalar_select %p267, %s264, 17
      %s269 = smul.addr %s268, 3
      %s270 = smul.addr %s266, 54
      %s271 = sadd.s32 %s269, %s270
      %s272 = smul.addr %s271, 8
      %s273 = scalar_lea.vmem %s1, %s272
      %p274 = pneg %p81
      %p275 = pneg %p78
      %s276 = sadd.s32 %s21, 2
      %p277 = scmp.lt.s32.totalorder %s20, 1
      %s278 = scalar_select %p277, %s20, 1
      %p279 = scmp.lt.s32.totalorder %s276, 17
      %s280 = scalar_select %p279, %s276, 17
      %s281 = smul.addr %s280, 3
      %s282 = smul.addr %s278, 54
      %s283 = sadd.s32 %s281, %s282
      %s284 = smul.addr %s283, 8
      %s285 = scalar_lea.vmem %s2, %s284
      %p286 = pneg %p111
      %p287 = pneg %p108
      %p288 = pneg %p132
      %p289 = pneg %p129
      %p290 = pneg %p153
      %p291 = pneg %p150
      %p292 = pneg %p181
      %p293 = pneg %p178
      %p294 = scmp.lt.s32.totalorder %s20, 1
      %s295 = scalar_select %p294, %s20, 1
      %p296 = scmp.lt.s32.totalorder %s21, 15
      %s297 = scalar_select %p296, %s21, 15
      %s298 = smul.addr %s297, 2
      %s299 = smul.addr %s295, 32
      %s300 = sadd.s32 %s298, %s299
      %s301 = smul.addr %s300, 8
      %s302 = scalar_lea.vmem %s5, %s301
      %p303 = scmp.lt.s32.totalorder %s20, 1
      %s304 = scalar_select %p303, %s20, 1
      %p305 = scmp.lt.s32.totalorder %s21, 17
      %s306 = scalar_select %p305, %s21, 17
      %s307 = smul.addr %s306, 3
      %s308 = smul.addr %s304, 54
      %s309 = sadd.s32 %s307, %s308
      %s310 = smul.addr %s309, 8
      %s311 = scalar_lea.vmem %s0, %s310
      %s312 = sadd.s32 %s21, 1
      %p313 = scmp.lt.s32.totalorder %s20, 1
      %s314 = scalar_select %p313, %s20, 1
      %p315 = scmp.lt.s32.totalorder %s312, 17
      %s316 = scalar_select %p315, %s312, 17
      %s317 = smul.addr %s316, 3
      %s318 = smul.addr %s314, 54
      %s319 = sadd.s32 %s317, %s318
      %s320 = smul.addr %s319, 8
      %s321 = scalar_lea.vmem %s1, %s320
      %s322 = sadd.s32 %s21, 1
      %s323 = sadd.s32 %s21, 2
      %p324 = scmp.lt.s32.totalorder %s20, 1
      %s325 = scalar_select %p324, %s20, 1
      %p326 = scmp.lt.s32.totalorder %s323, 17
      %s327 = scalar_select %p326, %s323, 17
      %s328 = smul.addr %s327, 3
      %s329 = smul.addr %s325, 54
      %s330 = sadd.s32 %s328, %s329
      %s331 = smul.addr %s330, 8
      %s332 = scalar_lea.vmem %s2, %s331
      %s333 = sadd.s32 %s21, 2
      %p334 = scmp.lt.s32.totalorder %s20, 1
      %s335 = scalar_select %p334, %s20, 1
      %p336 = scmp.lt.s32.totalorder %s21, 15
      %s337 = scalar_select %p336, %s21, 15
      %s338 = smul.addr %s337, 2
      %s339 = smul.addr %s335, 32
      %s340 = sadd.s32 %s338, %s339
      %s341 = smul.addr %s340, 8
      %s342 = scalar_lea.vmem %s5, %s341
      %v343 = vld [vmem:[%s311] sm:$0xff]
      %v344 = vld [vmem:[%s311 + $0x8] sm:$0xff]
      %v345 = vld [vmem:[%s311 + $0x10] sm:$0x3]
      %v346 = vld [vmem:[%s321] sm:$0xff]
      %v347 = vld [vmem:[%s321 + $0x8] sm:$0xff]
      %v348 = vld [vmem:[%s321 + $0x10] sm:$0x3]
      %v349 = vld [vmem:[%s332] sm:$0xff]
      %v350 = vld [vmem:[%s332 + $0x8] sm:$0xff]
      %v351 = vld [vmem:[%s332 + $0x10] sm:$0x3]
      %v352 = vld [vmem:[%s3] sm:$0xff]
      %v353 = vld [vmem:[%s3 + $0x8] sm:$0xff]
      %v354 = vld [vmem:[%s3 + $0x10] sm:$0xff]
      %v355 = vld [vmem:[%s3 + $0x18] sm:$0x7]
      %vm359 = vcmask 1046528
      %v360 = vrot.slane %v343, 1
      %v361 = vrot.slane %v344, 1
      %v362 = vsel %vm359, %v360, %v361
      %v363 = vrot.slane %v345, 1
      %v364 = vsel %vm359, %v361, %v363
      %v366 = vrot.slane %v352, 3
      %vm367 = vcmask 23552
      %v368 = vsel %vm367, %v362, 0
      %v370 = vsel %vm367, %v364, 0
      %vm372 = vcmask 1042432
      %v373 = vsel %vm372, %v366, 0
      %375 = vmatprep.subr.mxu0 0.0
      %376 = vmatpush1.msra.mxu0 %v373
      %377 = vmatprep.subr.mxu0 0.0
      %378 = vmatpush1.msra.mxu0 0.0
      %379 = vmatprep.subr.mxu0 0.0
      %380 = vmatpush1.msra.mxu0 0.0
      %381 = vmatprep.subr.mxu0 0.0
      %382 = vmatpush1.msra.mxu0 0.0
      %383 = vmatprep.subr.mxu0 0.0
      %384 = vmatpush1.msra.mxu0 0.0
      %385 = vmatprep.subr.mxu0 0.0
      %386 = vmatpush1.msra.mxu0 0.0
      %387 = vmatprep.subr.mxu0 0.0
      %388 = vmatpush1.msra.mxu0 0.0
      %389 = vmatprep.subr.mxu0 0.0
      %390 = vmatpush1.msra.mxu0 0.0
      %391 = vmatprep.subr.mxu0 0.0
      %392 = vmatpush1.msra.mxu0 0.0
      %393 = vmatprep.subr.mxu0 0.0
      %394 = vmatpush1.msra.mxu0 0.0
      %395 = vmatprep.subr.mxu0 0.0
      %396 = vmatpush1.msra.mxu0 0.0
      %397 = vmatprep.subr.mxu0 0.0
      %398 = vmatpush1.msra.mxu0 0.0
      %399 = vmatprep.subr.mxu0 0.0
      %400 = vmatpush1.msra.mxu0 0.0
      %401 = vmatprep.subr.mxu0 0.0
      %402 = vmatpush1.msra.mxu0 0.0
      %403 = vmatprep.subr.mxu0 0.0
      %404 = vmatpush1.msra.mxu0 0.0
      %405 = vmatprep.subr.mxu0 0.0
      %406 = vmatpush1.msra.mxu0 0.0
      %407 = vmatprep.subr.mxu0 0.0
      %408 = vmatpush1.msra.mxu0 0.0
      %409 = vmatprep.subr.mxu0 0.0
      %410 = vmatpush1.msra.mxu0 0.0
      %411 = vmatprep.subr.mxu0 0.0
      %412 = vmatpush1.msra.mxu0 0.0
      %413 = vmatprep.subr.mxu0 0.0
      %414 = vmatpush1.msra.mxu0 0.0
      %415 = vmatprep.subr.mxu0 0.0
      %416 = vmatpush1.msra.mxu0 0.0
      %417 = vmatprep.subr.mxu0 0.0
      %418 = vmatpush1.msra.mxu0 0.0
      %419 = vmatprep.subr.mxu0 0.0
      %420 = vmatpush1.msra.mxu0 0.0
      %421 = vmatprep.subr.mxu0 0.0
      %422 = vmatpush1.msra.mxu0 0.0
      %423 = vmatprep.subr.mxu0 0.0
      %424 = vmatpush1.msra.mxu0 0.0
      %425 = vmatprep.subr.mxu0 0.0
      %426 = vmatpush1.msra.mxu0 0.0
      %427 = vmatprep.subr.mxu0 0.0
      %428 = vmatpush1.msra.mxu0 0.0
      %429 = vmatprep.subr.mxu0 0.0
      %430 = vmatpush1.msra.mxu0 0.0
      %431 = vmatprep.subr.mxu0 0.0
      %432 = vmatpush1.msra.mxu0 0.0
      %433 = vmatprep.subr.mxu0 0.0
      %434 = vmatpush1.msra.mxu0 0.0
      %435 = vmatprep.subr.mxu0 0.0
      %436 = vmatpush1.msra.mxu0 0.0
      %437 = vmatprep.subr.mxu0 0.0
      %438 = vmatpush1.msra.mxu0 0.0
      %439 = vmatprep.mubr.f32.mxu0 0.0
      %440 = vmatmul.mubr.f32.gmra.mrb[0].mxu0 %v368
      %v441 = vpop.f32.mrb[0].mxu0
      %v442 = vadd.f32 0.0, %v441
      %v443 = vpop.f32.mrb[0].mxu0
      %444 = vmatprep.mubr.f32.mxu0 0.0
      %445 = vmatmul.mubr.f32.gmra.mrb[0].mxu0 %v370
      %v446 = vpop.f32.mrb[0].mxu0
      %v447 = vadd.f32 0.0, %v446
      %v448 = vpop.f32.mrb[0].mxu0
      %449 = vdwg.mxu0
      %v450 = vsel %vm367, %v343, 0
      %v452 = vsel %vm367, %v344, 0
      %v454 = vsel %vm372, %v352, 0
      %456 = vmatprep.subr.mxu0 0.0
      %457 = vmatpush1.msra.mxu0 %v454
      %458 = vmatprep.subr.mxu0 0.0
      %459 = vmatpush1.msra.mxu0 0.0
      %460 = vmatprep.subr.mxu0 0.0
      %461 = vmatpush1.msra.mxu0 0.0
      %462 = vmatprep.subr.mxu0 0.0
      %463 = vmatpush1.msra.mxu0 0.0
      %464 = vmatprep.subr.mxu0 0.0
      %465 = vmatpush1.msra.mxu0 0.0
      %466 = vmatprep.subr.mxu0 0.0
      %467 = vmatpush1.msra.mxu0 0.0
      %468 = vmatprep.subr.mxu0 0.0
      %469 = vmatpush1.msra.mxu0 0.0
      %470 = vmatprep.subr.mxu0 0.0
      %471 = vmatpush1.msra.mxu0 0.0
      %472 = vmatprep.subr.mxu0 0.0
      %473 = vmatpush1.msra.mxu0 0.0
      %474 = vmatprep.subr.mxu0 0.0
      %475 = vmatpush1.msra.mxu0 0.0
      %476 = vmatprep.subr.mxu0 0.0
      %477 = vmatpush1.msra.mxu0 0.0
      %478 = vmatprep.subr.mxu0 0.0
      %479 = vmatpush1.msra.mxu0 0.0
      %480 = vmatprep.subr.mxu0 0.0
      %481 = vmatpush1.msra.mxu0 0.0
      %482 = vmatprep.subr.mxu0 0.0
      %483 = vmatpush1.msra.mxu0 0.0
      %484 = vmatprep.subr.mxu0 0.0
      %485 = vmatpush1.msra.mxu0 0.0
      %486 = vmatprep.subr.mxu0 0.0
      %487 = vmatpush1.msra.mxu0 0.0
      %488 = vmatprep.subr.mxu0 0.0
      %489 = vmatpush1.msra.mxu0 0.0
      %490 = vmatprep.subr.mxu0 0.0
      %491 = vmatpush1.msra.mxu0 0.0
      %492 = vmatprep.subr.mxu0 0.0
      %493 = vmatpush1.msra.mxu0 0.0
      %494 = vmatprep.subr.mxu0 0.0
      %495 = vmatpush1.msra.mxu0 0.0
      %496 = vmatprep.subr.mxu0 0.0
      %497 = vmatpush1.msra.mxu0 0.0
      %498 = vmatprep.subr.mxu0 0.0
      %499 = vmatpush1.msra.mxu0 0.0
      %500 = vmatprep.subr.mxu0 0.0
      %501 = vmatpush1.msra.mxu0 0.0
      %502 = vmatprep.subr.mxu0 0.0
      %503 = vmatpush1.msra.mxu0 0.0
      %504 = vmatprep.subr.mxu0 0.0
      %505 = vmatpush1.msra.mxu0 0.0
      %506 = vmatprep.subr.mxu0 0.0
      %507 = vmatpush1.msra.mxu0 0.0
      %508 = vmatprep.subr.mxu0 0.0
      %509 = vmatpush1.msra.mxu0 0.0
      %510 = vmatprep.subr.mxu0 0.0
      %511 = vmatpush1.msra.mxu0 0.0
      %512 = vmatprep.subr.mxu0 0.0
      %513 = vmatpush1.msra.mxu0 0.0
      %514 = vmatprep.subr.mxu0 0.0
      %515 = vmatpush1.msra.mxu0 0.0
      %516 = vmatprep.subr.mxu0 0.0
      %517 = vmatpush1.msra.mxu0 0.0
      %518 = vmatprep.subr.mxu0 0.0
      %519 = vmatpush1.msra.mxu0 0.0
      %520 = vmatprep.mubr.f32.mxu0 0.0
      %521 = vmatmul.mubr.f32.gmra.mrb[0].mxu0 %v450
      %v522 = vpop.f32.mrb[0].mxu0
      %v523 = vadd.f32 %v442, %v522
      %v524 = vpop.f32.mrb[0].mxu0
      %525 = vmatprep.mubr.f32.mxu0 0.0
      %526 = vmatmul.mubr.f32.gmra.mrb[0].mxu0 %v452
      %v527 = vpop.f32.mrb[0].mxu0
      %v528 = vadd.f32 %v447, %v527
      %v529 = vpop.f32.mrb[0].mxu0
      %530 = vdwg.mxu0
      %vm531 = vcmask 1045504
      %v532 = vrot.slane %v343, 2
      %v533 = vrot.slane %v344, 2
      %v534 = vsel %vm531, %v532, %v533
      %v535 = vrot.slane %v345, 2
      %v536 = vsel %vm531, %v533, %v535
      %vm538 = vcmask 1041408
      %v539 = vrot.slane %v352, 6
      %v540 = vrot.slane %v353, 6
      %v541 = vsel %vm538, %v539, %v540
      %v542 = vsel %vm367, %v534, 0
      %v544 = vsel %vm367, %v536, 0
      %v546 = vsel %vm372, %v541, 0
      %548 = vmatprep.subr.mxu0 0.0
      %549 = vmatpush1.msra.mxu0 %v546
      %550 = vmatprep.subr.mxu0 0.0
      %551 = vmatpush1.msra.mxu0 0.0
      %552 = vmatprep.subr.mxu0 0.0
      %553 = vmatpush1.msra.mxu0 0.0
      %554 = vmatprep.subr.mxu0 0.0
      %555 = vmatpush1.msra.mxu0 0.0
      %556 = vmatprep.subr.mxu0 0.0
      %557 = vmatpush1.msra.mxu0 0.0
      %558 = vmatprep.subr.mxu0 0.0
      %559 = vmatpush1.msra.mxu0 0.0
      %560 = vmatprep.subr.mxu0 0.0
      %561 = vmatpush1.msra.mxu0 0.0
      %562 = vmatprep.subr.mxu0 0.0
      %563 = vmatpush1.msra.mxu0 0.0
      %564 = vmatprep.subr.mxu0 0.0
      %565 = vmatpush1.msra.mxu0 0.0
      %566 = vmatprep.subr.mxu0 0.0
      %567 = vmatpush1.msra.mxu0 0.0
      %568 = vmatprep.subr.mxu0 0.0
      %569 = vmatpush1.msra.mxu0 0.0
      %570 = vmatprep.subr.mxu0 0.0
      %571 = vmatpush1.msra.mxu0 0.0
      %572 = vmatprep.subr.mxu0 0.0
      %573 = vmatpush1.msra.mxu0 0.0
      %574 = vmatprep.subr.mxu0 0.0
      %575 = vmatpush1.msra.mxu0 0.0
      %576 = vmatprep.subr.mxu0 0.0
      %577 = vmatpush1.msra.mxu0 0.0
      %578 = vmatprep.subr.mxu0 0.0
      %579 = vmatpush1.msra.mxu0 0.0
      %580 = vmatprep.subr.mxu0 0.0
      %581 = vmatpush1.msra.mxu0 0.0
      %582 = vmatprep.subr.mxu0 0.0
      %583 = vmatpush1.msra.mxu0 0.0
      %584 = vmatprep.subr.mxu0 0.0
      %585 = vmatpush1.msra.mxu0 0.0
      %586 = vmatprep.subr.mxu0 0.0
      %587 = vmatpush1.msra.mxu0 0.0
      %588 = vmatprep.subr.mxu0 0.0
      %589 = vmatpush1.msra.mxu0 0.0
      %590 = vmatprep.subr.mxu0 0.0
      %591 = vmatpush1.msra.mxu0 0.0
      %592 = vmatprep.subr.mxu0 0.0
      %593 = vmatpush1.msra.mxu0 0.0
      %594 = vmatprep.subr.mxu0 0.0
      %595 = vmatpush1.msra.mxu0 0.0
      %596 = vmatprep.subr.mxu0 0.0
      %597 = vmatpush1.msra.mxu0 0.0
      %598 = vmatprep.subr.mxu0 0.0
      %599 = vmatpush1.msra.mxu0 0.0
      %600 = vmatprep.subr.mxu0 0.0
      %601 = vmatpush1.msra.mxu0 0.0
      %602 = vmatprep.subr.mxu0 0.0
      %603 = vmatpush1.msra.mxu0 0.0
      %604 = vmatprep.subr.mxu0 0.0
      %605 = vmatpush1.msra.mxu0 0.0
      %606 = vmatprep.subr.mxu0 0.0
      %607 = vmatpush1.msra.mxu0 0.0
      %608 = vmatprep.subr.mxu0 0.0
      %609 = vmatpush1.msra.mxu0 0.0
      %610 = vmatprep.subr.mxu0 0.0
      %611 = vmatpush1.msra.mxu0 0.0
      %612 = vmatprep.mubr.f32.mxu0 0.0
      %613 = vmatmul.mubr.f32.gmra.mrb[0].mxu0 %v542
      %v614 = vpop.f32.mrb[0].mxu0
      %v615 = vadd.f32 0.0, %v614
      %v616 = vpop.f32.mrb[0].mxu0
      %617 = vmatprep.mubr.f32.mxu0 0.0
      %618 = vmatmul.mubr.f32.gmra.mrb[0].mxu0 %v544
      %v619 = vpop.f32.mrb[0].mxu0
      %v620 = vadd.f32 0.0, %v619
      %v621 = vpop.f32.mrb[0].mxu0
      %622 = vdwg.mxu0
      %v623 = vadd.f32 %v523, %v615
      %v624 = vadd.f32 %v528, %v620
      %v625 = vrot.slane %v353, 1
      %v627 = vsel %vm367, %v346, 0
      %v630 = vsel %vm367, %v347, 0
      %v632 = vsel %vm372, %v625, 0
      %634 = vmatprep.subr.mxu0 0.0
      %635 = vmatpush1.msra.mxu0 %v632
      %636 = vmatprep.subr.mxu0 0.0
      %637 = vmatpush1.msra.mxu0 0.0
      %638 = vmatprep.subr.mxu0 0.0
      %639 = vmatpush1.msra.mxu0 0.0
      %640 = vmatprep.subr.mxu0 0.0
      %641 = vmatpush1.msra.mxu0 0.0
      %642 = vmatprep.subr.mxu0 0.0
      %643 = vmatpush1.msra.mxu0 0.0
      %644 = vmatprep.subr.mxu0 0.0
      %645 = vmatpush1.msra.mxu0 0.0
      %646 = vmatprep.subr.mxu0 0.0
      %647 = vmatpush1.msra.mxu0 0.0
      %648 = vmatprep.subr.mxu0 0.0
      %649 = vmatpush1.msra.mxu0 0.0
      %650 = vmatprep.subr.mxu0 0.0
      %651 = vmatpush1.msra.mxu0 0.0
      %652 = vmatprep.subr.mxu0 0.0
      %653 = vmatpush1.msra.mxu0 0.0
      %654 = vmatprep.subr.mxu0 0.0
      %655 = vmatpush1.msra.mxu0 0.0
      %656 = vmatprep.subr.mxu0 0.0
      %657 = vmatpush1.msra.mxu0 0.0
      %658 = vmatprep.subr.mxu0 0.0
      %659 = vmatpush1.msra.mxu0 0.0
      %660 = vmatprep.subr.mxu0 0.0
      %661 = vmatpush1.msra.mxu0 0.0
      %662 = vmatprep.subr.mxu0 0.0
      %663 = vmatpush1.msra.mxu0 0.0
      %664 = vmatprep.subr.mxu0 0.0
      %665 = vmatpush1.msra.mxu0 0.0
      %666 = vmatprep.subr.mxu0 0.0
      %667 = vmatpush1.msra.mxu0 0.0
      %668 = vmatprep.subr.mxu0 0.0
      %669 = vmatpush1.msra.mxu0 0.0
      %670 = vmatprep.subr.mxu0 0.0
      %671 = vmatpush1.msra.mxu0 0.0
      %672 = vmatprep.subr.mxu0 0.0
      %673 = vmatpush1.msra.mxu0 0.0
      %674 = vmatprep.subr.mxu0 0.0
      %675 = vmatpush1.msra.mxu0 0.0
      %676 = vmatprep.subr.mxu0 0.0
      %677 = vmatpush1.msra.mxu0 0.0
      %678 = vmatprep.subr.mxu0 0.0
      %679 = vmatpush1.msra.mxu0 0.0
      %680 = vmatprep.subr.mxu0 0.0
      %681 = vmatpush1.msra.mxu0 0.0
      %682 = vmatprep.subr.mxu0 0.0
      %683 = vmatpush1.msra.mxu0 0.0
      %684 = vmatprep.subr.mxu0 0.0
      %685 = vmatpush1.msra.mxu0 0.0
      %686 = vmatprep.subr.mxu0 0.0
      %687 = vmatpush1.msra.mxu0 0.0
      %688 = vmatprep.subr.mxu0 0.0
      %689 = vmatpush1.msra.mxu0 0.0
      %690 = vmatprep.subr.mxu0 0.0
      %691 = vmatpush1.msra.mxu0 0.0
      %692 = vmatprep.subr.mxu0 0.0
      %693 = vmatpush1.msra.mxu0 0.0
      %694 = vmatprep.subr.mxu0 0.0
      %695 = vmatpush1.msra.mxu0 0.0
      %696 = vmatprep.subr.mxu0 0.0
      %697 = vmatpush1.msra.mxu0 0.0
      %698 = vmatprep.mubr.f32.mxu0 0.0
      %699 = vmatmul.mubr.f32.gmra.mrb[0].mxu0 %v627
      %v700 = vpop.f32.mrb[0].mxu0
      %v701 = vadd.f32 0.0, %v700
      %v702 = vpop.f32.mrb[0].mxu0
      %703 = vmatprep.mubr.f32.mxu0 0.0
      %704 = vmatmul.mubr.f32.gmra.mrb[0].mxu0 %v630
      %v705 = vpop.f32.mrb[0].mxu0
      %v706 = vadd.f32 0.0, %v705
      %v707 = vpop.f32.mrb[0].mxu0
      %708 = vdwg.mxu0
      %v709 = vadd.f32 %v623, %v701
      %v710 = vadd.f32 %v624, %v706
      %v712 = vrot.slane %v346, 1
      %v713 = vrot.slane %v347, 1
      %v714 = vsel %vm359, %v712, %v713
      %v715 = vrot.slane %v348, 1
      %v716 = vsel %vm359, %v713, %v715
      %v717 = vrot.slane %v353, 4
      %v718 = vsel %vm367, %v714, 0
      %v720 = vsel %vm367, %v716, 0
      %v722 = vsel %vm372, %v717, 0
      %724 = vmatprep.subr.mxu0 0.0
      %725 = vmatpush1.msra.mxu0 %v722
      %726 = vmatprep.subr.mxu0 0.0
      %727 = vmatpush1.msra.mxu0 0.0
      %728 = vmatprep.subr.mxu0 0.0
      %729 = vmatpush1.msra.mxu0 0.0
      %730 = vmatprep.subr.mxu0 0.0
      %731 = vmatpush1.msra.mxu0 0.0
      %732 = vmatprep.subr.mxu0 0.0
      %733 = vmatpush1.msra.mxu0 0.0
      %734 = vmatprep.subr.mxu0 0.0
      %735 = vmatpush1.msra.mxu0 0.0
      %736 = vmatprep.subr.mxu0 0.0
      %737 = vmatpush1.msra.mxu0 0.0
      %738 = vmatprep.subr.mxu0 0.0
      %739 = vmatpush1.msra.mxu0 0.0
      %740 = vmatprep.subr.mxu0 0.0
      %741 = vmatpush1.msra.mxu0 0.0
      %742 = vmatprep.subr.mxu0 0.0
      %743 = vmatpush1.msra.mxu0 0.0
      %744 = vmatprep.subr.mxu0 0.0
      %745 = vmatpush1.msra.mxu0 0.0
      %746 = vmatprep.subr.mxu0 0.0
      %747 = vmatpush1.msra.mxu0 0.0
      %748 = vmatprep.subr.mxu0 0.0
      %749 = vmatpush1.msra.mxu0 0.0
      %750 = vmatprep.subr.mxu0 0.0
      %751 = vmatpush1.msra.mxu0 0.0
      %752 = vmatprep.subr.mxu0 0.0
      %753 = vmatpush1.msra.mxu0 0.0
      %754 = vmatprep.subr.mxu0 0.0
      %755 = vmatpush1.msra.mxu0 0.0
      %756 = vmatprep.subr.mxu0 0.0
      %757 = vmatpush1.msra.mxu0 0.0
      %758 = vmatprep.subr.mxu0 0.0
      %759 = vmatpush1.msra.mxu0 0.0
      %760 = vmatprep.subr.mxu0 0.0
      %761 = vmatpush1.msra.mxu0 0.0
      %762 = vmatprep.subr.mxu0 0.0
      %763 = vmatpush1.msra.mxu0 0.0
      %764 = vmatprep.subr.mxu0 0.0
      %765 = vmatpush1.msra.mxu0 0.0
      %766 = vmatprep.subr.mxu0 0.0
      %767 = vmatpush1.msra.mxu0 0.0
      %768 = vmatprep.subr.mxu0 0.0
      %769 = vmatpush1.msra.mxu0 0.0
      %770 = vmatprep.subr.mxu0 0.0
      %771 = vmatpush1.msra.mxu0 0.0
      %772 = vmatprep.subr.mxu0 0.0
      %773 = vmatpush1.msra.mxu0 0.0
      %774 = vmatprep.subr.mxu0 0.0
      %775 = vmatpush1.msra.mxu0 0.0
      %776 = vmatprep.subr.mxu0 0.0
      %777 = vmatpush1.msra.mxu0 0.0
      %778 = vmatprep.subr.mxu0 0.0
      %779 = vmatpush1.msra.mxu0 0.0
      %780 = vmatprep.subr.mxu0 0.0
      %781 = vmatpush1.msra.mxu0 0.0
      %782 = vmatprep.subr.mxu0 0.0
      %783 = vmatpush1.msra.mxu0 0.0
      %784 = vmatprep.subr.mxu0 0.0
      %785 = vmatpush1.msra.mxu0 0.0
      %786 = vmatprep.subr.mxu0 0.0
      %787 = vmatpush1.msra.mxu0 0.0
      %788 = vmatprep.mubr.f32.mxu0 0.0
      %789 = vmatmul.mubr.f32.gmra.mrb[0].mxu0 %v718
      %v790 = vpop.f32.mrb[0].mxu0
      %v791 = vadd.f32 0.0, %v790
      %v792 = vpop.f32.mrb[0].mxu0
      %793 = vmatprep.mubr.f32.mxu0 0.0
      %794 = vmatmul.mubr.f32.gmra.mrb[0].mxu0 %v720
      %v795 = vpop.f32.mrb[0].mxu0
      %v796 = vadd.f32 0.0, %v795
      %v797 = vpop.f32.mrb[0].mxu0
      %798 = vdwg.mxu0
      %v799 = vadd.f32 %v709, %v791
      %v800 = vadd.f32 %v710, %v796
      %v801 = vrot.slane %v346, 2
      %v802 = vrot.slane %v347, 2
      %v803 = vsel %vm531, %v801, %v802
      %v804 = vrot.slane %v348, 2
      %v805 = vsel %vm531, %v802, %v804
      %vm807 = vcmask 1040384
      %v808 = vrot.slane %v353, 7
      %v809 = vrot.slane %v354, 7
      %v810 = vsel %vm807, %v808, %v809
      %v811 = vsel %vm367, %v803, 0
      %v813 = vsel %vm367, %v805, 0
      %v815 = vsel %vm372, %v810, 0
      %817 = vmatprep.subr.mxu0 0.0
      %818 = vmatpush1.msra.mxu0 %v815
      %819 = vmatprep.subr.mxu0 0.0
      %820 = vmatpush1.msra.mxu0 0.0
      %821 = vmatprep.subr.mxu0 0.0
      %822 = vmatpush1.msra.mxu0 0.0
      %823 = vmatprep.subr.mxu0 0.0
      %824 = vmatpush1.msra.mxu0 0.0
      %825 = vmatprep.subr.mxu0 0.0
      %826 = vmatpush1.msra.mxu0 0.0
      %827 = vmatprep.subr.mxu0 0.0
      %828 = vmatpush1.msra.mxu0 0.0
      %829 = vmatprep.subr.mxu0 0.0
      %830 = vmatpush1.msra.mxu0 0.0
      %831 = vmatprep.subr.mxu0 0.0
      %832 = vmatpush1.msra.mxu0 0.0
      %833 = vmatprep.subr.mxu0 0.0
      %834 = vmatpush1.msra.mxu0 0.0
      %835 = vmatprep.subr.mxu0 0.0
      %836 = vmatpush1.msra.mxu0 0.0
      %837 = vmatprep.subr.mxu0 0.0
      %838 = vmatpush1.msra.mxu0 0.0
      %839 = vmatprep.subr.mxu0 0.0
      %840 = vmatpush1.msra.mxu0 0.0
      %841 = vmatprep.subr.mxu0 0.0
      %842 = vmatpush1.msra.mxu0 0.0
      %843 = vmatprep.subr.mxu0 0.0
      %844 = vmatpush1.msra.mxu0 0.0
      %845 = vmatprep.subr.mxu0 0.0
      %846 = vmatpush1.msra.mxu0 0.0
      %847 = vmatprep.subr.mxu0 0.0
      %848 = vmatpush1.msra.mxu0 0.0
      %849 = vmatprep.subr.mxu0 0.0
      %850 = vmatpush1.msra.mxu0 0.0
      %851 = vmatprep.subr.mxu0 0.0
      %852 = vmatpush1.msra.mxu0 0.0
      %853 = vmatprep.subr.mxu0 0.0
      %854 = vmatpush1.msra.mxu0 0.0
      %855 = vmatprep.subr.mxu0 0.0
      %856 = vmatpush1.msra.mxu0 0.0
      %857 = vmatprep.subr.mxu0 0.0
      %858 = vmatpush1.msra.mxu0 0.0
      %859 = vmatprep.subr.mxu0 0.0
      %860 = vmatpush1.msra.mxu0 0.0
      %861 = vmatprep.subr.mxu0 0.0
      %862 = vmatpush1.msra.mxu0 0.0
      %863 = vmatprep.subr.mxu0 0.0
      %864 = vmatpush1.msra.mxu0 0.0
      %865 = vmatprep.subr.mxu0 0.0
      %866 = vmatpush1.msra.mxu0 0.0
      %867 = vmatprep.subr.mxu0 0.0
      %868 = vmatpush1.msra.mxu0 0.0
      %869 = vmatprep.subr.mxu0 0.0
      %870 = vmatpush1.msra.mxu0 0.0
      %871 = vmatprep.subr.mxu0 0.0
      %872 = vmatpush1.msra.mxu0 0.0
      %873 = vmatprep.subr.mxu0 0.0
      %874 = vmatpush1.msra.mxu0 0.0
      %875 = vmatprep.subr.mxu0 0.0
      %876 = vmatpush1.msra.mxu0 0.0
      %877 = vmatprep.subr.mxu0 0.0
      %878 = vmatpush1.msra.mxu0 0.0
      %879 = vmatprep.subr.mxu0 0.0
      %880 = vmatpush1.msra.mxu0 0.0
      %881 = vmatprep.mubr.f32.mxu0 0.0
      %882 = vmatmul.mubr.f32.gmra.mrb[0].mxu0 %v811
      %v883 = vpop.f32.mrb[0].mxu0
      %v884 = vadd.f32 0.0, %v883
      %v885 = vpop.f32.mrb[0].mxu0
      %886 = vmatprep.mubr.f32.mxu0 0.0
      %887 = vmatmul.mubr.f32.gmra.mrb[0].mxu0 %v813
      %v888 = vpop.f32.mrb[0].mxu0
      %v889 = vadd.f32 0.0, %v888
      %v890 = vpop.f32.mrb[0].mxu0
      %891 = vdwg.mxu0
      %v892 = vadd.f32 %v799, %v884
      %v893 = vadd.f32 %v800, %v889
      %v894 = vrot.slane %v354, 2
      %v896 = vsel %vm367, %v349, 0
      %v899 = vsel %vm367, %v350, 0
      %v901 = vsel %vm372, %v894, 0
      %903 = vmatprep.subr.mxu0 0.0
      %904 = vmatpush1.msra.mxu0 %v901
      %905 = vmatprep.subr.mxu0 0.0
      %906 = vmatpush1.msra.mxu0 0.0
      %907 = vmatprep.subr.mxu0 0.0
      %908 = vmatpush1.msra.mxu0 0.0
      %909 = vmatprep.subr.mxu0 0.0
      %910 = vmatpush1.msra.mxu0 0.0
      %911 = vmatprep.subr.mxu0 0.0
      %912 = vmatpush1.msra.mxu0 0.0
      %913 = vmatprep.subr.mxu0 0.0
      %914 = vmatpush1.msra.mxu0 0.0
      %915 = vmatprep.subr.mxu0 0.0
      %916 = vmatpush1.msra.mxu0 0.0
      %917 = vmatprep.subr.mxu0 0.0
      %918 = vmatpush1.msra.mxu0 0.0
      %919 = vmatprep.subr.mxu0 0.0
      %920 = vmatpush1.msra.mxu0 0.0
      %921 = vmatprep.subr.mxu0 0.0
      %922 = vmatpush1.msra.mxu0 0.0
      %923 = vmatprep.subr.mxu0 0.0
      %924 = vmatpush1.msra.mxu0 0.0
      %925 = vmatprep.subr.mxu0 0.0
      %926 = vmatpush1.msra.mxu0 0.0
      %927 = vmatprep.subr.mxu0 0.0
      %928 = vmatpush1.msra.mxu0 0.0
      %929 = vmatprep.subr.mxu0 0.0
      %930 = vmatpush1.msra.mxu0 0.0
      %931 = vmatprep.subr.mxu0 0.0
      %932 = vmatpush1.msra.mxu0 0.0
      %933 = vmatprep.subr.mxu0 0.0
      %934 = vmatpush1.msra.mxu0 0.0
      %935 = vmatprep.subr.mxu0 0.0
      %936 = vmatpush1.msra.mxu0 0.0
      %937 = vmatprep.subr.mxu0 0.0
      %938 = vmatpush1.msra.mxu0 0.0
      %939 = vmatprep.subr.mxu0 0.0
      %940 = vmatpush1.msra.mxu0 0.0
      %941 = vmatprep.subr.mxu0 0.0
      %942 = vmatpush1.msra.mxu0 0.0
      %943 = vmatprep.subr.mxu0 0.0
      %944 = vmatpush1.msra.mxu0 0.0
      %945 = vmatprep.subr.mxu0 0.0
      %946 = vmatpush1.msra.mxu0 0.0
      %947 = vmatprep.subr.mxu0 0.0
      %948 = vmatpush1.msra.mxu0 0.0
      %949 = vmatprep.subr.mxu0 0.0
      %950 = vmatpush1.msra.mxu0 0.0
      %951 = vmatprep.subr.mxu0 0.0
      %952 = vmatpush1.msra.mxu0 0.0
      %953 = vmatprep.subr.mxu0 0.0
      %954 = vmatpush1.msra.mxu0 0.0
      %955 = vmatprep.subr.mxu0 0.0
      %956 = vmatpush1.msra.mxu0 0.0
      %957 = vmatprep.subr.mxu0 0.0
      %958 = vmatpush1.msra.mxu0 0.0
      %959 = vmatprep.subr.mxu0 0.0
      %960 = vmatpush1.msra.mxu0 0.0
      %961 = vmatprep.subr.mxu0 0.0
      %962 = vmatpush1.msra.mxu0 0.0
      %963 = vmatprep.subr.mxu0 0.0
      %964 = vmatpush1.msra.mxu0 0.0
      %965 = vmatprep.subr.mxu0 0.0
      %966 = vmatpush1.msra.mxu0 0.0
      %967 = vmatprep.mubr.f32.mxu0 0.0
      %968 = vmatmul.mubr.f32.gmra.mrb[0].mxu0 %v896
      %v969 = vpop.f32.mrb[0].mxu0
      %v970 = vadd.f32 0.0, %v969
      %v971 = vpop.f32.mrb[0].mxu0
      %972 = vmatprep.mubr.f32.mxu0 0.0
      %973 = vmatmul.mubr.f32.gmra.mrb[0].mxu0 %v899
      %v974 = vpop.f32.mrb[0].mxu0
      %v975 = vadd.f32 0.0, %v974
      %v976 = vpop.f32.mrb[0].mxu0
      %977 = vdwg.mxu0
      %v978 = vadd.f32 %v892, %v970
      %v979 = vadd.f32 %v893, %v975
      %v981 = vrot.slane %v349, 1
      %v982 = vrot.slane %v350, 1
      %v983 = vsel %vm359, %v981, %v982
      %v984 = vrot.slane %v351, 1
      %v985 = vsel %vm359, %v982, %v984
      %v986 = vrot.slane %v354, 5
      %v987 = vsel %vm367, %v983, 0
      %v989 = vsel %vm367, %v985, 0
      %v991 = vsel %vm372, %v986, 0
      %993 = vmatprep.subr.mxu0 0.0
      %994 = vmatpush1.msra.mxu0 %v991
      %995 = vmatprep.subr.mxu0 0.0
      %996 = vmatpush1.msra.mxu0 0.0
      %997 = vmatprep.subr.mxu0 0.0
      %998 = vmatpush1.msra.mxu0 0.0
      %999 = vmatprep.subr.mxu0 0.0
      %1000 = vmatpush1.msra.mxu0 0.0
      %1001 = vmatprep.subr.mxu0 0.0
      %1002 = vmatpush1.msra.mxu0 0.0
      %1003 = vmatprep.subr.mxu0 0.0
      %1004 = vmatpush1.msra.mxu0 0.0
      %1005 = vmatprep.subr.mxu0 0.0
      %1006 = vmatpush1.msra.mxu0 0.0
      %1007 = vmatprep.subr.mxu0 0.0
      %1008 = vmatpush1.msra.mxu0 0.0
      %1009 = vmatprep.subr.mxu0 0.0
      %1010 = vmatpush1.msra.mxu0 0.0
      %1011 = vmatprep.subr.mxu0 0.0
      %1012 = vmatpush1.msra.mxu0 0.0
      %1013 = vmatprep.subr.mxu0 0.0
      %1014 = vmatpush1.msra.mxu0 0.0
      %1015 = vmatprep.subr.mxu0 0.0
      %1016 = vmatpush1.msra.mxu0 0.0
      %1017 = vmatprep.subr.mxu0 0.0
      %1018 = vmatpush1.msra.mxu0 0.0
      %1019 = vmatprep.subr.mxu0 0.0
      %1020 = vmatpush1.msra.mxu0 0.0
      %1021 = vmatprep.subr.mxu0 0.0
      %1022 = vmatpush1.msra.mxu0 0.0
      %1023 = vmatprep.subr.mxu0 0.0
      %1024 = vmatpush1.msra.mxu0 0.0
      %1025 = vmatprep.subr.mxu0 0.0
      %1026 = vmatpush1.msra.mxu0 0.0
      %1027 = vmatprep.subr.mxu0 0.0
      %1028 = vmatpush1.msra.mxu0 0.0
      %1029 = vmatprep.subr.mxu0 0.0
      %1030 = vmatpush1.msra.mxu0 0.0
      %1031 = vmatprep.subr.mxu0 0.0
      %1032 = vmatpush1.msra.mxu0 0.0
      %1033 = vmatprep.subr.mxu0 0.0
      %1034 = vmatpush1.msra.mxu0 0.0
      %1035 = vmatprep.subr.mxu0 0.0
      %1036 = vmatpush1.msra.mxu0 0.0
      %1037 = vmatprep.subr.mxu0 0.0
      %1038 = vmatpush1.msra.mxu0 0.0
      %1039 = vmatprep.subr.mxu0 0.0
      %1040 = vmatpush1.msra.mxu0 0.0
      %1041 = vmatprep.subr.mxu0 0.0
      %1042 = vmatpush1.msra.mxu0 0.0
      %1043 = vmatprep.subr.mxu0 0.0
      %1044 = vmatpush1.msra.mxu0 0.0
      %1045 = vmatprep.subr.mxu0 0.0
      %1046 = vmatpush1.msra.mxu0 0.0
      %1047 = vmatprep.subr.mxu0 0.0
      %1048 = vmatpush1.msra.mxu0 0.0
      %1049 = vmatprep.subr.mxu0 0.0
      %1050 = vmatpush1.msra.mxu0 0.0
      %1051 = vmatprep.subr.mxu0 0.0
      %1052 = vmatpush1.msra.mxu0 0.0
      %1053 = vmatprep.subr.mxu0 0.0
      %1054 = vmatpush1.msra.mxu0 0.0
      %1055 = vmatprep.subr.mxu0 0.0
      %1056 = vmatpush1.msra.mxu0 0.0
      %1057 = vmatprep.mubr.f32.mxu0 0.0
      %1058 = vmatmul.mubr.f32.gmra.mrb[0].mxu0 %v987
      %v1059 = vpop.f32.mrb[0].mxu0
      %v1060 = vadd.f32 0.0, %v1059
      %v1061 = vpop.f32.mrb[0].mxu0
      %1062 = vmatprep.mubr.f32.mxu0 0.0
      %1063 = vmatmul.mubr.f32.gmra.mrb[0].mxu0 %v989
      %v1064 = vpop.f32.mrb[0].mxu0
      %v1065 = vadd.f32 0.0, %v1064
      %v1066 = vpop.f32.mrb[0].mxu0
      %1067 = vdwg.mxu0
      %v1068 = vadd.f32 %v978, %v1060
      %v1069 = vadd.f32 %v979, %v1065
      %v1070 = vrot.slane %v349, 2
      %v1071 = vrot.slane %v350, 2
      %v1072 = vsel %vm531, %v1070, %v1071
      %v1073 = vrot.slane %v351, 2
      %v1074 = vsel %vm531, %v1071, %v1073
      %v1075 = vsel %vm367, %v1072, 0
      %v1077 = vsel %vm367, %v1074, 0
      %v1080 = vsel %vm372, %v355, 0
      %1082 = vmatprep.subr.mxu0 0.0
      %1083 = vmatpush1.msra.mxu0 %v1080
      %1084 = vmatprep.subr.mxu0 0.0
      %1085 = vmatpush1.msra.mxu0 0.0
      %1086 = vmatprep.subr.mxu0 0.0
      %1087 = vmatpush1.msra.mxu0 0.0
      %1088 = vmatprep.subr.mxu0 0.0
      %1089 = vmatpush1.msra.mxu0 0.0
      %1090 = vmatprep.subr.mxu0 0.0
      %1091 = vmatpush1.msra.mxu0 0.0
      %1092 = vmatprep.subr.mxu0 0.0
      %1093 = vmatpush1.msra.mxu0 0.0
      %1094 = vmatprep.subr.mxu0 0.0
      %1095 = vmatpush1.msra.mxu0 0.0
      %1096 = vmatprep.subr.mxu0 0.0
      %1097 = vmatpush1.msra.mxu0 0.0
      %1098 = vmatprep.subr.mxu0 0.0
      %1099 = vmatpush1.msra.mxu0 0.0
      %1100 = vmatprep.subr.mxu0 0.0
      %1101 = vmatpush1.msra.mxu0 0.0
      %1102 = vmatprep.subr.mxu0 0.0
      %1103 = vmatpush1.msra.mxu0 0.0
      %1104 = vmatprep.subr.mxu0 0.0
      %1105 = vmatpush1.msra.mxu0 0.0
      %1106 = vmatprep.subr.mxu0 0.0
      %1107 = vmatpush1.msra.mxu0 0.0
      %1108 = vmatprep.subr.mxu0 0.0
      %1109 = vmatpush1.msra.mxu0 0.0
      %1110 = vmatprep.subr.mxu0 0.0
      %1111 = vmatpush1.msra.mxu0 0.0
      %1112 = vmatprep.subr.mxu0 0.0
      %1113 = vmatpush1.msra.mxu0 0.0
      %1114 = vmatprep.subr.mxu0 0.0
      %1115 = vmatpush1.msra.mxu0 0.0
      %1116 = vmatprep.subr.mxu0 0.0
      %1117 = vmatpush1.msra.mxu0 0.0
      %1118 = vmatprep.subr.mxu0 0.0
      %1119 = vmatpush1.msra.mxu0 0.0
      %1120 = vmatprep.subr.mxu0 0.0
      %1121 = vmatpush1.msra.mxu0 0.0
      %1122 = vmatprep.subr.mxu0 0.0
      %1123 = vmatpush1.msra.mxu0 0.0
      %1124 = vmatprep.subr.mxu0 0.0
      %1125 = vmatpush1.msra.mxu0 0.0
      %1126 = vmatprep.subr.mxu0 0.0
      %1127 = vmatpush1.msra.mxu0 0.0
      %1128 = vmatprep.subr.mxu0 0.0
      %1129 = vmatpush1.msra.mxu0 0.0
      %1130 = vmatprep.subr.mxu0 0.0
      %1131 = vmatpush1.msra.mxu0 0.0
      %1132 = vmatprep.subr.mxu0 0.0
      %1133 = vmatpush1.msra.mxu0 0.0
      %1134 = vmatprep.subr.mxu0 0.0
      %1135 = vmatpush1.msra.mxu0 0.0
      %1136 = vmatprep.subr.mxu0 0.0
      %1137 = vmatpush1.msra.mxu0 0.0
      %1138 = vmatprep.subr.mxu0 0.0
      %1139 = vmatpush1.msra.mxu0 0.0
      %1140 = vmatprep.subr.mxu0 0.0
      %1141 = vmatpush1.msra.mxu0 0.0
      %1142 = vmatprep.subr.mxu0 0.0
      %1143 = vmatpush1.msra.mxu0 0.0
      %1144 = vmatprep.subr.mxu0 0.0
      %1145 = vmatpush1.msra.mxu0 0.0
      %1146 = vmatprep.mubr.f32.mxu0 0.0
      %1147 = vmatmul.mubr.f32.gmra.mrb[0].mxu0 %v1075
      %v1148 = vpop.f32.mrb[0].mxu0
      %v1149 = vadd.f32 0.0, %v1148
      %v1150 = vpop.f32.mrb[0].mxu0
      %1151 = vmatprep.mubr.f32.mxu0 0.0
      %1152 = vmatmul.mubr.f32.gmra.mrb[0].mxu0 %v1077
      %v1153 = vpop.f32.mrb[0].mxu0
      %v1154 = vadd.f32 0.0, %v1153
      %v1155 = vpop.f32.mrb[0].mxu0
      %1156 = vdwg.mxu0
      %v1157 = vadd.f32 %v1068, %v1149
      %v1158 = vadd.f32 %v1069, %v1154
      %v1159 = vld [vmem:[%s4] sm:$0x1]
      %v1161 = vlaneseq
      %v1162 = vshrl.u32 %v1161, 7
      %v1163 = vsub.s32 0, %v1162
      %v1164 = vrot.slane %v1159, %v1163
      %v1166 = vadd.f32 %v1157, %v1164
      %v1167 = vadd.f32 %v1158, %v1164
      %vm1168 = vcmask 97280
      %1169 = vst.msk [vmem:[%s342] sm:$0xff] %vm1168, %v1166
      %1170 = vst.msk [vmem:[%s342 + $0x8] sm:$0xff] %vm1168, %v1167
      %p1171 = scmp.lt.s32.totalorder %s20, 1
      %s1172 = scalar_select %p1171, %s20, 1
      %p1173 = scmp.lt.s32.totalorder %s21, 15
      %s1174 = scalar_select %p1173, %s21, 15
      %s1175 = smul.addr %s1174, 2
      %s1176 = smul.addr %s1172, 32
      %s1177 = sadd.s32 %s1175, %s1176
      %s1178 = smul.addr %s1177, 8
      %s1179 = scalar_lea.vmem %s5, %s1178
      // Predicated region
      $region41: #{tpu_custom_call.1} parent=39 // pred_check
        %p1180 = pneg %p178
      $region42: #{tpu_custom_call.1} parent=39 // pred_check_branch
        %1182 = sbr.rel (%p1180) target = $region44
      $region43: #{tpu_custom_call.1} parent=39 // pred_region
        _
      $region44: #{tpu_custom_call.1} parent=39 // pred_fallthru
        _
    $region40: #{tpu_custom_call.1} parent=5 // pred_fallthru
      _
    %p1183 = scmp.le.s32.totalorder 2, %s11
    // Predicated region
    $region45: #{tpu_custom_call.1} parent=5 // pred_check
      %p1184 = pneg %p1183
    $region46: #{tpu_custom_call.1} parent=5 // pred_check_branch
      %1186 = sbr.rel (%p1184) target = $region48
    $region47: #{tpu_custom_call.1} parent=5 // pred_region
      %s1187 = ssub.s32 %s11, 2
      // Predicated region
      $region49: #{tpu_custom_call.1} parent=47 // pred_check
        %p1188 = pneg %p184
      $region50: #{tpu_custom_call.1} parent=47 // pred_check_branch
        %1190 = sbr.rel (%p1188) target = $region52
      $region51: #{tpu_custom_call.1} parent=47 // pred_region
        %p1191 = scmp.lt.s32.totalorder %s22, 1
        %s1192 = scalar_select %p1191, %s22, 1
        %p1193 = scmp.lt.s32.totalorder %s23, 15
        %s1194 = scalar_select %p1193, %s23, 15
        %s1195 = smul.addr %s1194, 2
        %s1196 = smul.addr %s1192, 32
        %s1197 = sadd.s32 %s1195, %s1196
        %s1198 = smul.addr %s1197, 8
        %s1199 = scalar_lea.vmem %s5, %s1198
      $region52: #{tpu_custom_call.1} parent=47 // pred_fallthru
        _
    $region48: #{tpu_custom_call.1} parent=5 // pred_fallthru
      _
  $region6: #{tpu_custom_call.1} parent=0 // loop_footer
    %s15 = sadd.s32 1, %s11
  $region7: #{tpu_custom_call.1} parent=0 // loop_footer_branch
    %10 = sbr.rel target = $region3
  $region8: #{tpu_custom_call.1} parent=0 // loop_exit
    _

</llo_original>
